<compile_context>
chip_gen: v5e
topology: v5e:2x2
jax: 0.10.0
libtpu: 0.0.40
codegen_flags: <defaults>
</compile_context>

<pallas_src>
import functools
import numpy as np
import jax
import jax.numpy as jnp
from jax.experimental import pallas as pl
from jax.experimental.pallas import tpu as pltpu

# ----- model hyper-parameters (small, synthetic config) -----
D_MODEL = 32     # CONTEXT_HIDDEN_DIM
N_HEAD  = 2      # TRANSFORMER.NUM_HEAD
D_K     = 8      # TRANSFORMER.KEY_DIM
D_V     = 8      # TRANSFORMER.VAL_DIM
D_INNER = 64     # TRANSFORMER.INNER_DIM
LN_EPS  = 1e-5

HDK     = N_HEAD * D_K                      # 16
PROJ_W  = 2 * HDK + N_HEAD * D_MODEL        # 96 per cell: [Wq | Wk | Wvfc_0 | Wvfc_1]
VEC_W   = max(D_MODEL, D_INNER, HDK)        # 64
N_VEC   = 9
NEG_INF = -1e9


def _round_up(x, m):
    return ((x + m - 1) // m) * m


def _layer_norm(x, g, b):
    mu = jnp.mean(x, axis=-1, keepdims=True)
    var = jnp.mean((x - mu) ** 2, axis=-1, keepdims=True)
    return (x - mu) * jax.lax.rsqrt(var + LN_EPS) * g + b


# --------------------------------------------------------------------------
# Fused Pallas kernel: ONE invocation computes both cross-attention cells
# over the whole (flattened, padded) batch.
#   feats rows [0, bl)  = padded text features
#   feats rows [bl,2bl) = padded visual features
#   output rows [0, bl)  = textual_output (txt cell: q=text,  kv=visual)
#   output rows [bl,2bl) = visual_output  (vis cell: q=visual, kv=text)
# --------------------------------------------------------------------------
def _fused_cells_kernel(feats_ref, rowinfo_ref, colinfo_ref,
                        wbig_ref, w1_ref, w2_ref, vec_ref, o_ref, *, bl):
    feats = feats_ref[...]          # (2bl, D) f32
    rowinfo = rowinfo_ref[...]      # (2, bl): row0 = image id, row1 = validity
    colinfo = colinfo_ref[...]      # (bl, 2): col0 = image id, col1 = validity
    vec = vec_ref[...]              # (2, N_VEC, VEC_W) packed biases / LN params

    seg_r = rowinfo[0:1, :]         # (1, bl) key-side image id
    val_r = rowinfo[1:2, :]         # (1, bl) key validity
    seg_c = colinfo[:, 0:1]         # (bl, 1) query-side image id
    qmask = colinfo[:, 1:2]         # (bl, 1) query validity

    # additive attention bias built in-kernel (no O(bl^2) HBM->VMEM DMA):
    # 0 inside own image & valid key, -1e9 otherwise.
    bias = jnp.where((seg_c == seg_r) & (val_r > 0.5), 0.0, NEG_INF)   # (bl, bl)

    # ---- single fused projection for BOTH cells and BOTH streams (MXU) ----
    # [text ; visual] @ [Wq_t|Wk_t|Wvfc_t0|Wvfc_t1 | Wq_v|Wk_v|Wvfc_v0|Wvfc_v1]
    proj = jnp.dot(feats.astype(jnp.bfloat16), wbig_ref[...],
                   preferred_element_type=jnp.float32)                 # (2bl, 192)

    out1s = []
    for c in range(2):   # c=0: txt cell (q=text, kv=visual); c=1: vis cell
        q_rows = slice(0, bl) if c == 0 else slice(bl, 2 * bl)
        kv_rows = slice(bl, 2 * bl) if c == 0 else slice(0, bl)
        base = c * PROJ_W
        vcell = vec[c]
        bq, bk = vcell[0:1, :HDK], vcell[1:2, :HDK]
        bfc = vcell[2:3, :D_MODEL]          # output-proj bias (value biases folded in)
        g1, be1 = vcell[3:4, :D_MODEL], vcell[4:5, :D_MODEL]

        # 1/sqrt(d_k) already folded into Wq / bq at pack time.
        q = proj[q_rows, base:base + HDK] + bq                         # (bl, HDK)
        k = proj[kv_rows, base + HDK:base + 2 * HDK] + bk              # (bl, HDK)

        ctx = jnp.zeros((bl, D_MODEL), jnp.float32)
        for h in range(N_HEAD):
            qh = q[:, h * D_K:(h + 1) * D_K].astype(jnp.bfloat16)
            kh = k[:, h * D_K:(h + 1) * D_K].astype(jnp.bfloat16)
            logits = jax.lax.dot_general(
                qh, kh, dimension_numbers=(((1,), (1,)), ((), ())),
                preferred_element_type=jnp.float32) + bias             # (bl, bl)
            m = jnp.max(logits, axis=-1, keepdims=True)
            e = jnp.exp(logits - m)
            p = e * pl.reciprocal(jnp.sum(e, axis=-1, keepdims=True), approx=True)
            # value already projected to d_model: kv @ (Wv_h @ Wfc_h)
            vph = proj[kv_rows, base + 2 * HDK + h * D_MODEL:
                                base + 2 * HDK + (h + 1) * D_MODEL]
            ctx = ctx + jnp.dot(p.astype(jnp.bfloat16), vph.astype(jnp.bfloat16),
                                preferred_element_type=jnp.float32)

        x = feats[q_rows]                                              # residual stream
        out1s.append(_layer_norm(ctx + bfc + x, g1, be1) * qmask)

    # ---- fused position-wise FFN across BOTH cells ----
    # rows: [txt-cell out1 ; vis-cell out1]; W1 concatenated along N (32x128),
    # W2 stacked along K (128x32); each row keeps only its own cell's columns.
    out1_all = jnp.concatenate(out1s, axis=0)                          # (2bl, D)
    h1 = jnp.dot(out1_all.astype(jnp.bfloat16), w1_ref[...],
                 preferred_element_type=jnp.float32)                   # (2bl, 2*D_INNER)
    b1_cat = jnp.concatenate([vec[0, 5:6, :D_INNER],
                              vec[1, 5:6, :D_INNER]], axis=1)          # (1, 2*D_INNER)
    row_id = jax.lax.broadcasted_iota(jnp.int32, (2 * bl, 2 * D_INNER), 0)
    col_id = jax.lax.broadcasted_iota(jnp.int32, (2 * bl, 2 * D_INNER), 1)
    keep = jnp.logical_xor(row_id < bl, col_id >= D_INNER)   # own-cell columns only
    h1 = jnp.where(keep, jnp.maximum(h1 + b1_cat, 0.0), 0.0)
    h2 = jnp.dot(h1.astype(jnp.bfloat16), w2_ref[...],
                 preferred_element_type=jnp.float32)                   # (2bl, D)

    out2s = []
    for c in range(2):
        rows = slice(0, bl) if c == 0 else slice(bl, 2 * bl)
        vcell = vec[c]
        b2 = vcell[6:7, :D_MODEL]
        g2, be2 = vcell[7:8, :D_MODEL], vcell[8:9, :D_MODEL]
        out2s.append(_layer_norm(h2[rows] + b2 + out1s[c], g2, be2) * qmask)

    o_ref[...] = jnp.concatenate(out2s, axis=0)


# --------------------------------------------------------------------------
# Parameter packing (host-side, one-time): fold 1/sqrt(d_k) into Wq/bq,
# fuse Wv@Wfc per head, fold the value biases into the output-proj bias,
# pack all vectors into one (N_VEC, VEC_W) slab.
# --------------------------------------------------------------------------
def pack_cell_params(p):
    scale = 1.0 / float(D_K) ** 0.5
    wq_s = p["wq"] * scale
    bq_s = p["bq"] * scale
    wvfc = [p["wv"][:, h * D_V:(h + 1) * D_V] @ p["wfc"][h * D_V:(h + 1) * D_V, :]
            for h in range(N_HEAD)]
    w_big = jnp.concatenate([wq_s, p["wk"]] + wvfc, axis=1)             # (D, PROJ_W)
    bfc_total = p["bfc"] + sum(
        p["bv"][:, h * D_V:(h + 1) * D_V] @ p["wfc"][h * D_V:(h + 1) * D_V, :]
        for h in range(N_HEAD))                                         # (1, D)

    def pad_row(v):
        return jnp.pad(v, ((0, 0), (0, VEC_W - v.shape[1])))

    vec = jnp.concatenate(
        [pad_row(bq_s), pad_row(p["bk"]), pad_row(bfc_total),
         pad_row(p["g1"]), pad_row(p["be1"]), pad_row(p["b1"]),
         pad_row(p["b2"]), pad_row(p["g2"]), pad_row(p["be2"])], axis=0)  # (N_VEC, VEC_W)

    return (w_big.astype(jnp.bfloat16),
            p["w1"].astype(jnp.bfloat16),
            p["w2"].astype(jnp.bfloat16),
            vec.astype(jnp.float32))


# --------------------------------------------------------------------------
# Single_Layer_Cross_Attention forward (factory: pack params once, cache the
# per-num_objs compiled path, jit pad + kernel + unpad into one dispatch).
# --------------------------------------------------------------------------
def make_single_layer_cross_attention(params_vis, params_txt):
    pk_txt = pack_cell_params(params_txt)    # cell 0
    pk_vis = pack_cell_params(params_vis)    # cell 1
    w_big = jnp.concatenate([pk_txt[0], pk_vis[0]], axis=1)    # (D, 2*PROJ_W)   bf16
    w1    = jnp.concatenate([pk_txt[1], pk_vis[1]], axis=1)    # (D, 2*D_INNER)  bf16
    w2    = jnp.concatenate([pk_txt[2], pk_vis[2]], axis=0)    # (2*D_INNER, D)  bf16
    vec   = jnp.stack([pk_txt[3], pk_vis[3]], axis=0)          # (2, N_VEC, VEC_W) f32

    @functools.lru_cache(maxsize=64)
    def _compiled(num_objs_key):
        num_objs = list(num_objs_key)
        B = len(num_objs)
        pad_len = _round_up(max(max(num_objs), 1), 8)           # sublane-aligned padding
        bl = B * pad_len

        gather_idx = np.concatenate(
            [b * pad_len + np.arange(n) for b, n in enumerate(num_objs)]).astype(np.int32)
        seg = np.repeat(np.arange(B), pad_len).astype(np.float32)
        valid = np.zeros((bl,), np.float32)
        valid[gather_idx] = 1.0
        rowinfo = jnp.asarray(np.stack([seg, valid], axis=0))   # (2, bl)
        colinfo = jnp.asarray(np.stack([seg, valid], axis=1))   # (bl, 2)
        gidx = jnp.asarray(gather_idx)

        call = pl.pallas_call(
            functools.partial(_fused_cells_kernel, bl=bl),
            out_shape=jax.ShapeDtypeStruct((2 * bl, D_MODEL), jnp.float32),
            grid=(1,),                                          # single step: no serial
            in_specs=[                                          # 2-cell grid on 1-TC chips
                pl.BlockSpec((2 * bl, D_MODEL), lambda i: (0, 0)),       # feats
                pl.BlockSpec((2, bl), lambda i: (0, 0)),                 # row mask info
                pl.BlockSpec((bl, 2), lambda i: (0, 0)),                 # col mask info
                pl.BlockSpec((D_MODEL, 2 * PROJ_W), lambda i: (0, 0)),   # fused proj W
                pl.BlockSpec((D_MODEL, 2 * D_INNER), lambda i: (0, 0)),  # FFN W1 (cat N)
                pl.BlockSpec((2 * D_INNER, D_MODEL), lambda i: (0, 0)),  # FFN W2 (stack K)
                pl.BlockSpec((2, N_VEC, VEC_W), lambda i: (0, 0, 0)),    # bias/LN slab
            ],
            out_specs=pl.BlockSpec((2 * bl, D_MODEL), lambda i: (0, 0)),
            compiler_params=pltpu.CompilerParams(
                dimension_semantics=("arbitrary",)),
        )

        @jax.jit
        def fwd(visual_feats, text_feats):
            # pad (one scatter each), run fused kernel, unpad (one gather each)
            t_pad = jnp.zeros((bl, D_MODEL), jnp.float32).at[gidx].set(text_feats)
            v_pad = jnp.zeros((bl, D_MODEL), jnp.float32).at[gidx].set(visual_feats)
            feats = jnp.concatenate([t_pad, v_pad], axis=0)              # (2bl, D)
            out = call(feats, rowinfo, colinfo, w_big, w1, w2, vec)
            textual_output = jnp.take(out[:bl], gidx, axis=0)
            visual_output = jnp.take(out[bl:], gidx, axis=0)
            return visual_output, textual_output

        return fwd

    def forward(visual_feats, text_feats, num_objs):
        fwd = _compiled(tuple(int(n) for n in num_objs))
        return fwd(visual_feats, text_feats)

    return forward


# --------------------------------------------------------------------------
# Parameter init + pure-JAX f32 reference (mirrors the PyTorch math)
# --------------------------------------------------------------------------
def init_cell_params(key):
    ks = jax.random.split(key, 10)
    s = 0.1
    return {
        "wq":  s * jax.random.normal(ks[0], (D_MODEL, N_HEAD * D_K), jnp.float32),
        "bq":  s * jax.random.normal(ks[1], (1, N_HEAD * D_K), jnp.float32),
        "wk":  s * jax.random.normal(ks[2], (D_MODEL, N_HEAD * D_K), jnp.float32),
        "bk":  s * jax.random.normal(ks[3], (1, N_HEAD * D_K), jnp.float32),
        "wv":  s * jax.random.normal(ks[4], (D_MODEL, N_HEAD * D_V), jnp.float32),
        "bv":  s * jax.random.normal(ks[5], (1, N_HEAD * D_V), jnp.float32),
        "wfc": s * jax.random.normal(ks[6], (N_HEAD * D_V, D_MODEL), jnp.float32),
        "bfc": s * jax.random.normal(ks[7], (1, D_MODEL), jnp.float32),
        "g1":  jnp.ones((1, D_MODEL), jnp.float32),
        "be1": jnp.zeros((1, D_MODEL), jnp.float32),
        "w1":  s * jax.random.normal(ks[8], (D_MODEL, D_INNER), jnp.float32),
        "b1":  jnp.zeros((1, D_INNER), jnp.float32),
        "w2":  s * jax.random.normal(ks[9], (D_INNER, D_MODEL), jnp.float32),
        "b2":  jnp.zeros((1, D_MODEL), jnp.float32),
        "g2":  jnp.ones((1, D_MODEL), jnp.float32),
        "be2": jnp.zeros((1, D_MODEL), jnp.float32),
    }


def _ca_cell_reference(q_pad, kv_pad, kmask, qmask, p):
    B, L, _ = q_pad.shape
    q = q_pad @ p["wq"] + p["bq"]
    k = kv_pad @ p["wk"] + p["bk"]
    v = kv_pad @ p["wv"] + p["bv"]
    qh = q.reshape(B, L, N_HEAD, D_K).transpose(0, 2, 1, 3)
    kh = k.reshape(B, L, N_HEAD, D_K).transpose(0, 2, 1, 3)
    vh = v.reshape(B, L, N_HEAD, D_V).transpose(0, 2, 1, 3)
    logits = jnp.einsum("bhid,bhjd->bhij", qh, kh) / np.sqrt(D_K)
    logits = jnp.where(kmask[:, None, :, :] > 0.5, logits, -jnp.inf)
    attn = jax.nn.softmax(logits, axis=-1)
    out = jnp.einsum("bhij,bhjd->bhid", attn, vh)
    out = out.transpose(0, 2, 1, 3).reshape(B, L, N_HEAD * D_V)
    out = out @ p["wfc"] + p["bfc"]
    out = _layer_norm(out + q_pad, p["g1"], p["be1"]) * qmask
    h1 = jax.nn.relu(out @ p["w1"] + p["b1"])
    h2 = h1 @ p["w2"] + p["b2"]
    out2 = _layer_norm(h2 + out, p["g2"], p["be2"]) * qmask
    return out2


if __name__ == "__main__":
    key = jax.random.PRNGKey(0)
    num_objs = [5, 3]                 # two "images", 5 and 3 objects
    N = sum(num_objs)

    k1, k2, k3, k4 = jax.random.split(key, 4)
    visual_feats = jax.random.normal(k1, (N, D_MODEL), jnp.float32)
    text_feats   = jax.random.normal(k2, (N, D_MODEL), jnp.float32)
    params_vis = init_cell_params(k3)
    params_txt = init_cell_params(k4)

    layer = make_single_layer_cross_attention(params_vis, params_txt)
    vis_out, txt_out = layer(visual_feats, text_feats, num_objs)
    jax.block_until_ready((vis_out, txt_out))
    # second call: exercises the num_objs cache (no host rebuild / recompile)
    vis_out, txt_out = layer(visual_feats, text_feats, num_objs)
    jax.block_until_ready((vis_out, txt_out))

    # -------- f32 reference check (kernel uses bf16 MXU inputs) --------
    B = len(num_objs)
    pad_len = _round_up(max(num_objs), 8)
    gather_idx = np.concatenate(
        [b * pad_len + np.arange(n) for b, n in enumerate(num_objs)]).astype(np.int32)

    def pad3(f):
        flat = jnp.zeros((B * pad_len, D_MODEL), jnp.float32).at[gather_idx].set(f)
        return flat.reshape(B, pad_len, D_MODEL)

    v_pad3, t_pad3 = pad3(visual_feats), pad3(text_feats)
    valid = np.zeros((B * pad_len,), np.float32)
    valid[gather_idx] = 1.0
    valid = valid.reshape(B, pad_len)
    kmask = jnp.asarray(valid)[:, None, :]
    qmask3 = jnp.asarray(valid)[:, :, None]

    txt_ref = _ca_cell_reference(t_pad3, v_pad3, kmask, qmask3, params_txt)
    vis_ref = _ca_cell_reference(v_pad3, t_pad3, kmask, qmask3, params_vis)
    txt_ref = txt_ref.reshape(B * pad_len, D_MODEL)[gather_idx]
    vis_ref = vis_ref.reshape(B * pad_len, D_MODEL)[gather_idx]

    np.testing.assert_allclose(np.asarray(txt_out), np.asarray(txt_ref),
                               rtol=3e-2, atol=3e-2)
    np.testing.assert_allclose(np.asarray(vis_out), np.asarray(vis_ref),
                               rtol=3e-2, atol=3e-2)
    assert vis_out.shape == (N, D_MODEL) and txt_out.shape == (N, D_MODEL)
    print("KERNEL_OK")
</pallas_src>

<mosaic_0001>
module attributes {stable_mosaic.version = 11 : i64} {
  func.func @_fused_cells_kernel(%arg0: i32, %arg1: memref<32x32xf32, #tpu.memory_space<vmem>>, %arg2: memref<2x16xf32, #tpu.memory_space<vmem>>, %arg3: memref<16x2xf32, #tpu.memory_space<vmem>>, %arg4: memref<32x192xbf16, #tpu.memory_space<vmem>>, %arg5: memref<32x128xbf16, #tpu.memory_space<vmem>>, %arg6: memref<128x32xbf16, #tpu.memory_space<vmem>>, %arg7: memref<2x9x64xf32, #tpu.memory_space<vmem>>, %arg8: memref<32x32xf32, #tpu.memory_space<vmem>>) attributes {dimension_semantics = [#tpu.dimension_semantics<arbitrary>], iteration_bounds = array<i64: 1>, scalar_prefetch = 0 : i64, scratch_operands = 0 : i64, tpu.core_type = #tpu.core_type<tc>, window_params = [{pipeline_mode = #tpu.pipeline_mode<synchronous>, transform_indices = @transform_0, window_bounds = array<i64: 32, 32>}, {pipeline_mode = #tpu.pipeline_mode<synchronous>, transform_indices = @transform_1, window_bounds = array<i64: 2, 16>}, {pipeline_mode = #tpu.pipeline_mode<synchronous>, transform_indices = @transform_2, window_bounds = array<i64: 16, 2>}, {pipeline_mode = #tpu.pipeline_mode<synchronous>, transform_indices = @transform_3, window_bounds = array<i64: 32, 192>}, {pipeline_mode = #tpu.pipeline_mode<synchronous>, transform_indices = @transform_4, window_bounds = array<i64: 32, 128>}, {pipeline_mode = #tpu.pipeline_mode<synchronous>, transform_indices = @transform_5, window_bounds = array<i64: 128, 32>}, {pipeline_mode = #tpu.pipeline_mode<synchronous>, transform_indices = @transform_6, window_bounds = array<i64: 2, 9, 64>}, {pipeline_mode = #tpu.pipeline_mode<synchronous>, transform_indices = @transform_7, window_bounds = array<i64: 32, 32>}]} {
    %c0 = arith.constant 0 : index
    %c0_0 = arith.constant 0 : index
    %0 = vector.load %arg1[%c0, %c0_0] : memref<32x32xf32, #tpu.memory_space<vmem>>, vector<32x32xf32>
    %c0_1 = arith.constant 0 : index
    %c0_2 = arith.constant 0 : index
    %1 = vector.load %arg2[%c0_1, %c0_2] : memref<2x16xf32, #tpu.memory_space<vmem>>, vector<2x16xf32>
    %c0_3 = arith.constant 0 : index
    %c0_4 = arith.constant 0 : index
    %2 = vector.load %arg3[%c0_3, %c0_4] : memref<16x2xf32, #tpu.memory_space<vmem>>, vector<16x2xf32>
    %c0_5 = arith.constant 0 : index
    %c0_6 = arith.constant 0 : index
    %c0_7 = arith.constant 0 : index
    %3 = vector.load %arg7[%c0_5, %c0_6, %c0_7] : memref<2x9x64xf32, #tpu.memory_space<vmem>>, vector<2x9x64xf32>
    %4 = vector.extract_strided_slice %1 {offsets = [0, 0], sizes = [1, 16], strides = [1, 1]} : vector<2x16xf32> to vector<1x16xf32>
    %5 = vector.extract_strided_slice %1 {offsets = [1, 0], sizes = [1, 16], strides = [1, 1]} : vector<2x16xf32> to vector<1x16xf32>
    %6 = vector.extract_strided_slice %2 {offsets = [0, 0], sizes = [16, 1], strides = [1, 1]} : vector<16x2xf32> to vector<16x1xf32>
    %7 = vector.extract_strided_slice %2 {offsets = [0, 1], sizes = [16, 1], strides = [1, 1]} : vector<16x2xf32> to vector<16x1xf32>
    %8 = vector.broadcast %6 : vector<16x1xf32> to vector<16x16xf32>
    %9 = vector.broadcast %4 : vector<1x16xf32> to vector<16x16xf32>
    %10 = arith.cmpf oeq, %8, %9 : vector<16x16xf32>
    %cst = arith.constant 5.000000e-01 : f32
    %11 = vector.broadcast %cst : f32 to vector<1x16xf32>
    %12 = arith.cmpf ogt, %5, %11 : vector<1x16xf32>
    %13 = vector.broadcast %12 : vector<1x16xi1> to vector<16x16xi1>
    %14 = arith.andi %10, %13 : vector<16x16xi1>
    %cst_8 = arith.constant 0.000000e+00 : f32
    %cst_9 = arith.constant -1.000000e+09 : f32
    %15 = vector.broadcast %cst_8 : f32 to vector<16x16xf32>
    %16 = vector.broadcast %cst_9 : f32 to vector<16x16xf32>
    %17 = arith.select %14, %15, %16 : vector<16x16xi1>, vector<16x16xf32>
    %18 = arith.truncf %0 : vector<32x32xf32> to vector<32x32xbf16>
    %c0_10 = arith.constant 0 : index
    %c0_11 = arith.constant 0 : index
    %19 = vector.load %arg4[%c0_10, %c0_11] : memref<32x192xbf16, #tpu.memory_space<vmem>>, vector<32x192xbf16>
    %cst_12 = arith.constant dense<0.000000e+00> : vector<32x192xf32>
    %20 = tpu.matmul %18, %19, %cst_12 {dimension_numbers = #tpu.dot_dimension_numbers<[1], [0], [0], [1], [0, 0, 1, 1], [], []>} : vector<32x32xbf16>, vector<32x192xbf16>, vector<32x192xf32> -> vector<32x192xf32>
    %21 = vector.extract_strided_slice %3 {offsets = [0, 0, 0], sizes = [1, 9, 64], strides = [1, 1, 1]} : vector<2x9x64xf32> to vector<1x9x64xf32>
    %22 = vector.shape_cast %21 : vector<1x9x64xf32> to vector<9x64xf32>
    %23 = vector.extract_strided_slice %22 {offsets = [0, 0], sizes = [1, 16], strides = [1, 1]} : vector<9x64xf32> to vector<1x16xf32>
    %24 = vector.extract_strided_slice %22 {offsets = [1, 0], sizes = [1, 16], strides = [1, 1]} : vector<9x64xf32> to vector<1x16xf32>
    %25 = vector.extract_strided_slice %22 {offsets = [2, 0], sizes = [1, 32], strides = [1, 1]} : vector<9x64xf32> to vector<1x32xf32>
    %26 = vector.extract_strided_slice %22 {offsets = [3, 0], sizes = [1, 32], strides = [1, 1]} : vector<9x64xf32> to vector<1x32xf32>
    %27 = vector.extract_strided_slice %22 {offsets = [4, 0], sizes = [1, 32], strides = [1, 1]} : vector<9x64xf32> to vector<1x32xf32>
    %28 = vector.extract_strided_slice %20 {offsets = [0, 0], sizes = [16, 16], strides = [1, 1]} : vector<32x192xf32> to vector<16x16xf32>
    %29 = vector.broadcast %23 : vector<1x16xf32> to vector<16x16xf32>
    %30 = arith.addf %28, %29 : vector<16x16xf32>
    %31 = vector.extract_strided_slice %20 {offsets = [16, 16], sizes = [16, 16], strides = [1, 1]} : vector<32x192xf32> to vector<16x16xf32>
    %32 = vector.broadcast %24 : vector<1x16xf32> to vector<16x16xf32>
    %33 = arith.addf %31, %32 : vector<16x16xf32>
    %cst_13 = arith.constant 0.000000e+00 : f32
    %34 = vector.broadcast %cst_13 : f32 to vector<16x32xf32>
    %35 = vector.extract_strided_slice %30 {offsets = [0, 0], sizes = [16, 8], strides = [1, 1]} : vector<16x16xf32> to vector<16x8xf32>
    %36 = arith.truncf %35 : vector<16x8xf32> to vector<16x8xbf16>
    %37 = vector.extract_strided_slice %33 {offsets = [0, 0], sizes = [16, 8], strides = [1, 1]} : vector<16x16xf32> to vector<16x8xf32>
    %38 = arith.truncf %37 : vector<16x8xf32> to vector<16x8xbf16>
    %cst_14 = arith.constant dense<0.000000e+00> : vector<16x16xf32>
    %39 = tpu.matmul %36, %38, %cst_14 {dimension_numbers = #tpu.dot_dimension_numbers<[1], [1], [0], [0], [0, 0, 1, 0], [], []>} : vector<16x8xbf16>, vector<16x8xbf16>, vector<16x16xf32> -> vector<16x16xf32>
    %40 = arith.addf %39, %17 : vector<16x16xf32>
    %cst_15 = arith.constant dense<0xFF800000> : vector<16xf32>
    %41 = vector.multi_reduction <maximumf>, %40, %cst_15 [1] : vector<16x16xf32> to vector<16xf32>
    %42 = vector.shape_cast %41 : vector<16xf32> to vector<16x1xf32>
    %43 = vector.broadcast %42 : vector<16x1xf32> to vector<16x16xf32>
    %44 = arith.subf %40, %43 : vector<16x16xf32>
    %45 = math.exp %44 : vector<16x16xf32>
    %cst_16 = arith.constant dense<0.000000e+00> : vector<16xf32>
    %46 = vector.multi_reduction <add>, %45, %cst_16 [1] : vector<16x16xf32> to vector<16xf32>
    %47 = vector.shape_cast %46 : vector<16xf32> to vector<16x1xf32>
    %48 = tpu.reciprocal %47 {approx = true} : vector<16x1xf32> -> vector<16x1xf32>
    %49 = vector.broadcast %48 : vector<16x1xf32> to vector<16x16xf32>
    %50 = arith.mulf %45, %49 : vector<16x16xf32>
    %51 = vector.extract_strided_slice %20 {offsets = [16, 32], sizes = [16, 32], strides = [1, 1]} : vector<32x192xf32> to vector<16x32xf32>
    %52 = arith.truncf %50 : vector<16x16xf32> to vector<16x16xbf16>
    %53 = arith.truncf %51 : vector<16x32xf32> to vector<16x32xbf16>
    %cst_17 = arith.constant dense<0.000000e+00> : vector<16x32xf32>
    %54 = tpu.matmul %52, %53, %cst_17 {dimension_numbers = #tpu.dot_dimension_numbers<[1], [0], [0], [1], [0, 0, 1, 1], [], []>} : vector<16x16xbf16>, vector<16x32xbf16>, vector<16x32xf32> -> vector<16x32xf32>
    %55 = arith.addf %34, %54 : vector<16x32xf32>
    %56 = vector.extract_strided_slice %30 {offsets = [0, 8], sizes = [16, 8], strides = [1, 1]} : vector<16x16xf32> to vector<16x8xf32>
    %57 = arith.truncf %56 : vector<16x8xf32> to vector<16x8xbf16>
    %58 = vector.extract_strided_slice %33 {offsets = [0, 8], sizes = [16, 8], strides = [1, 1]} : vector<16x16xf32> to vector<16x8xf32>
    %59 = arith.truncf %58 : vector<16x8xf32> to vector<16x8xbf16>
    %cst_18 = arith.constant dense<0.000000e+00> : vector<16x16xf32>
    %60 = tpu.matmul %57, %59, %cst_18 {dimension_numbers = #tpu.dot_dimension_numbers<[1], [1], [0], [0], [0, 0, 1, 0], [], []>} : vector<16x8xbf16>, vector<16x8xbf16>, vector<16x16xf32> -> vector<16x16xf32>
    %61 = arith.addf %60, %17 : vector<16x16xf32>
    %cst_19 = arith.constant dense<0xFF800000> : vector<16xf32>
    %62 = vector.multi_reduction <maximumf>, %61, %cst_19 [1] : vector<16x16xf32> to vector<16xf32>
    %63 = vector.shape_cast %62 : vector<16xf32> to vector<16x1xf32>
    %64 = vector.broadcast %63 : vector<16x1xf32> to vector<16x16xf32>
    %65 = arith.subf %61, %64 : vector<16x16xf32>
    %66 = math.exp %65 : vector<16x16xf32>
    %cst_20 = arith.constant dense<0.000000e+00> : vector<16xf32>
    %67 = vector.multi_reduction <add>, %66, %cst_20 [1] : vector<16x16xf32> to vector<16xf32>
    %68 = vector.shape_cast %67 : vector<16xf32> to vector<16x1xf32>
    %69 = tpu.reciprocal %68 {approx = true} : vector<16x1xf32> -> vector<16x1xf32>
    %70 = vector.broadcast %69 : vector<16x1xf32> to vector<16x16xf32>
    %71 = arith.mulf %66, %70 : vector<16x16xf32>
    %72 = vector.extract_strided_slice %20 {offsets = [16, 64], sizes = [16, 32], strides = [1, 1]} : vector<32x192xf32> to vector<16x32xf32>
    %73 = arith.truncf %71 : vector<16x16xf32> to vector<16x16xbf16>
    %74 = arith.truncf %72 : vector<16x32xf32> to vector<16x32xbf16>
    %cst_21 = arith.constant dense<0.000000e+00> : vector<16x32xf32>
    %75 = tpu.matmul %73, %74, %cst_21 {dimension_numbers = #tpu.dot_dimension_numbers<[1], [0], [0], [1], [0, 0, 1, 1], [], []>} : vector<16x16xbf16>, vector<16x32xbf16>, vector<16x32xf32> -> vector<16x32xf32>
    %76 = arith.addf %55, %75 : vector<16x32xf32>
    %77 = vector.extract_strided_slice %0 {offsets = [0, 0], sizes = [16, 32], strides = [1, 1]} : vector<32x32xf32> to vector<16x32xf32>
    %78 = vector.broadcast %25 : vector<1x32xf32> to vector<16x32xf32>
    %79 = arith.addf %76, %78 : vector<16x32xf32>
    %80 = arith.addf %79, %77 : vector<16x32xf32>
    %cst_22 = arith.constant dense<0.000000e+00> : vector<16xf32>
    %81 = vector.multi_reduction <add>, %80, %cst_22 [1] : vector<16x32xf32> to vector<16xf32>
    %82 = vector.shape_cast %81 : vector<16xf32> to vector<16x1xf32>
    %cst_23 = arith.constant 3.200000e+01 : f32
    %83 = vector.broadcast %cst_23 : f32 to vector<16x1xf32>
    %84 = arith.divf %82, %83 : vector<16x1xf32>
    %85 = vector.broadcast %84 : vector<16x1xf32> to vector<16x32xf32>
    %86 = arith.subf %80, %85 : vector<16x32xf32>
    %87 = arith.mulf %86, %86 : vector<16x32xf32>
    %cst_24 = arith.constant dense<0.000000e+00> : vector<16xf32>
    %88 = vector.multi_reduction <add>, %87, %cst_24 [1] : vector<16x32xf32> to vector<16xf32>
    %89 = vector.shape_cast %88 : vector<16xf32> to vector<16x1xf32>
    %cst_25 = arith.constant 3.200000e+01 : f32
    %90 = vector.broadcast %cst_25 : f32 to vector<16x1xf32>
    %91 = arith.divf %89, %90 : vector<16x1xf32>
    %92 = vector.broadcast %84 : vector<16x1xf32> to vector<16x32xf32>
    %93 = arith.subf %80, %92 : vector<16x32xf32>
    %cst_26 = arith.constant 9.99999974E-6 : f32
    %94 = vector.broadcast %cst_26 : f32 to vector<16x1xf32>
    %95 = arith.addf %91, %94 : vector<16x1xf32>
    %96 = math.rsqrt %95 : vector<16x1xf32>
    %97 = vector.broadcast %96 : vector<16x1xf32> to vector<16x32xf32>
    %98 = arith.mulf %93, %97 : vector<16x32xf32>
    %99 = vector.broadcast %26 : vector<1x32xf32> to vector<16x32xf32>
    %100 = arith.mulf %98, %99 : vector<16x32xf32>
    %101 = vector.broadcast %27 : vector<1x32xf32> to vector<16x32xf32>
    %102 = arith.addf %100, %101 : vector<16x32xf32>
    %103 = vector.broadcast %7 : vector<16x1xf32> to vector<16x32xf32>
    %104 = arith.mulf %102, %103 : vector<16x32xf32>
    %105 = vector.extract_strided_slice %3 {offsets = [1, 0, 0], sizes = [1, 9, 64], strides = [1, 1, 1]} : vector<2x9x64xf32> to vector<1x9x64xf32>
    %106 = vector.shape_cast %105 : vector<1x9x64xf32> to vector<9x64xf32>
    %107 = vector.extract_strided_slice %106 {offsets = [0, 0], sizes = [1, 16], strides = [1, 1]} : vector<9x64xf32> to vector<1x16xf32>
    %108 = vector.extract_strided_slice %106 {offsets = [1, 0], sizes = [1, 16], strides = [1, 1]} : vector<9x64xf32> to vector<1x16xf32>
    %109 = vector.extract_strided_slice %106 {offsets = [2, 0], sizes = [1, 32], strides = [1, 1]} : vector<9x64xf32> to vector<1x32xf32>
    %110 = vector.extract_strided_slice %106 {offsets = [3, 0], sizes = [1, 32], strides = [1, 1]} : vector<9x64xf32> to vector<1x32xf32>
    %111 = vector.extract_strided_slice %106 {offsets = [4, 0], sizes = [1, 32], strides = [1, 1]} : vector<9x64xf32> to vector<1x32xf32>
    %112 = vector.extract_strided_slice %20 {offsets = [16, 96], sizes = [16, 16], strides = [1, 1]} : vector<32x192xf32> to vector<16x16xf32>
    %113 = vector.broadcast %107 : vector<1x16xf32> to vector<16x16xf32>
    %114 = arith.addf %112, %113 : vector<16x16xf32>
    %115 = vector.extract_strided_slice %20 {offsets = [0, 112], sizes = [16, 16], strides = [1, 1]} : vector<32x192xf32> to vector<16x16xf32>
    %116 = vector.broadcast %108 : vector<1x16xf32> to vector<16x16xf32>
    %117 = arith.addf %115, %116 : vector<16x16xf32>
    %cst_27 = arith.constant 0.000000e+00 : f32
    %118 = vector.broadcast %cst_27 : f32 to vector<16x32xf32>
    %119 = vector.extract_strided_slice %114 {offsets = [0, 0], sizes = [16, 8], strides = [1, 1]} : vector<16x16xf32> to vector<16x8xf32>
    %120 = arith.truncf %119 : vector<16x8xf32> to vector<16x8xbf16>
    %121 = vector.extract_strided_slice %117 {offsets = [0, 0], sizes = [16, 8], strides = [1, 1]} : vector<16x16xf32> to vector<16x8xf32>
    %122 = arith.truncf %121 : vector<16x8xf32> to vector<16x8xbf16>
    %cst_28 = arith.constant dense<0.000000e+00> : vector<16x16xf32>
    %123 = tpu.matmul %120, %122, %cst_28 {dimension_numbers = #tpu.dot_dimension_numbers<[1], [1], [0], [0], [0, 0, 1, 0], [], []>} : vector<16x8xbf16>, vector<16x8xbf16>, vector<16x16xf32> -> vector<16x16xf32>
    %124 = arith.addf %123, %17 : vector<16x16xf32>
    %cst_29 = arith.constant dense<0xFF800000> : vector<16xf32>
    %125 = vector.multi_reduction <maximumf>, %124, %cst_29 [1] : vector<16x16xf32> to vector<16xf32>
    %126 = vector.shape_cast %125 : vector<16xf32> to vector<16x1xf32>
    %127 = vector.broadcast %126 : vector<16x1xf32> to vector<16x16xf32>
    %128 = arith.subf %124, %127 : vector<16x16xf32>
    %129 = math.exp %128 : vector<16x16xf32>
    %cst_30 = arith.constant dense<0.000000e+00> : vector<16xf32>
    %130 = vector.multi_reduction <add>, %129, %cst_30 [1] : vector<16x16xf32> to vector<16xf32>
    %131 = vector.shape_cast %130 : vector<16xf32> to vector<16x1xf32>
    %132 = tpu.reciprocal %131 {approx = true} : vector<16x1xf32> -> vector<16x1xf32>
    %133 = vector.broadcast %132 : vector<16x1xf32> to vector<16x16xf32>
    %134 = arith.mulf %129, %133 : vector<16x16xf32>
    %135 = vector.extract_strided_slice %20 {offsets = [0, 128], sizes = [16, 32], strides = [1, 1]} : vector<32x192xf32> to vector<16x32xf32>
    %136 = arith.truncf %134 : vector<16x16xf32> to vector<16x16xbf16>
    %137 = arith.truncf %135 : vector<16x32xf32> to vector<16x32xbf16>
    %cst_31 = arith.constant dense<0.000000e+00> : vector<16x32xf32>
    %138 = tpu.matmul %136, %137, %cst_31 {dimension_numbers = #tpu.dot_dimension_numbers<[1], [0], [0], [1], [0, 0, 1, 1], [], []>} : vector<16x16xbf16>, vector<16x32xbf16>, vector<16x32xf32> -> vector<16x32xf32>
    %139 = arith.addf %118, %138 : vector<16x32xf32>
    %140 = vector.extract_strided_slice %114 {offsets = [0, 8], sizes = [16, 8], strides = [1, 1]} : vector<16x16xf32> to vector<16x8xf32>
    %141 = arith.truncf %140 : vector<16x8xf32> to vector<16x8xbf16>
    %142 = vector.extract_strided_slice %117 {offsets = [0, 8], sizes = [16, 8], strides = [1, 1]} : vector<16x16xf32> to vector<16x8xf32>
    %143 = arith.truncf %142 : vector<16x8xf32> to vector<16x8xbf16>
    %cst_32 = arith.constant dense<0.000000e+00> : vector<16x16xf32>
    %144 = tpu.matmul %141, %143, %cst_32 {dimension_numbers = #tpu.dot_dimension_numbers<[1], [1], [0], [0], [0, 0, 1, 0], [], []>} : vector<16x8xbf16>, vector<16x8xbf16>, vector<16x16xf32> -> vector<16x16xf32>
    %145 = arith.addf %144, %17 : vector<16x16xf32>
    %cst_33 = arith.constant dense<0xFF800000> : vector<16xf32>
    %146 = vector.multi_reduction <maximumf>, %145, %cst_33 [1] : vector<16x16xf32> to vector<16xf32>
    %147 = vector.shape_cast %146 : vector<16xf32> to vector<16x1xf32>
    %148 = vector.broadcast %147 : vector<16x1xf32> to vector<16x16xf32>
    %149 = arith.subf %145, %148 : vector<16x16xf32>
    %150 = math.exp %149 : vector<16x16xf32>
    %cst_34 = arith.constant dense<0.000000e+00> : vector<16xf32>
    %151 = vector.multi_reduction <add>, %150, %cst_34 [1] : vector<16x16xf32> to vector<16xf32>
    %152 = vector.shape_cast %151 : vector<16xf32> to vector<16x1xf32>
    %153 = tpu.reciprocal %152 {approx = true} : vector<16x1xf32> -> vector<16x1xf32>
    %154 = vector.broadcast %153 : vector<16x1xf32> to vector<16x16xf32>
    %155 = arith.mulf %150, %154 : vector<16x16xf32>
    %156 = vector.extract_strided_slice %20 {offsets = [0, 160], sizes = [16, 32], strides = [1, 1]} : vector<32x192xf32> to vector<16x32xf32>
    %157 = arith.truncf %155 : vector<16x16xf32> to vector<16x16xbf16>
    %158 = arith.truncf %156 : vector<16x32xf32> to vector<16x32xbf16>
    %cst_35 = arith.constant dense<0.000000e+00> : vector<16x32xf32>
    %159 = tpu.matmul %157, %158, %cst_35 {dimension_numbers = #tpu.dot_dimension_numbers<[1], [0], [0], [1], [0, 0, 1, 1], [], []>} : vector<16x16xbf16>, vector<16x32xbf16>, vector<16x32xf32> -> vector<16x32xf32>
    %160 = arith.addf %139, %159 : vector<16x32xf32>
    %161 = vector.extract_strided_slice %0 {offsets = [16, 0], sizes = [16, 32], strides = [1, 1]} : vector<32x32xf32> to vector<16x32xf32>
    %162 = vector.broadcast %109 : vector<1x32xf32> to vector<16x32xf32>
    %163 = arith.addf %160, %162 : vector<16x32xf32>
    %164 = arith.addf %163, %161 : vector<16x32xf32>
    %cst_36 = arith.constant dense<0.000000e+00> : vector<16xf32>
    %165 = vector.multi_reduction <add>, %164, %cst_36 [1] : vector<16x32xf32> to vector<16xf32>
    %166 = vector.shape_cast %165 : vector<16xf32> to vector<16x1xf32>
    %cst_37 = arith.constant 3.200000e+01 : f32
    %167 = vector.broadcast %cst_37 : f32 to vector<16x1xf32>
    %168 = arith.divf %166, %167 : vector<16x1xf32>
    %169 = vector.broadcast %168 : vector<16x1xf32> to vector<16x32xf32>
    %170 = arith.subf %164, %169 : vector<16x32xf32>
    %171 = arith.mulf %170, %170 : vector<16x32xf32>
    %cst_38 = arith.constant dense<0.000000e+00> : vector<16xf32>
    %172 = vector.multi_reduction <add>, %171, %cst_38 [1] : vector<16x32xf32> to vector<16xf32>
    %173 = vector.shape_cast %172 : vector<16xf32> to vector<16x1xf32>
    %cst_39 = arith.constant 3.200000e+01 : f32
    %174 = vector.broadcast %cst_39 : f32 to vector<16x1xf32>
    %175 = arith.divf %173, %174 : vector<16x1xf32>
    %176 = vector.broadcast %168 : vector<16x1xf32> to vector<16x32xf32>
    %177 = arith.subf %164, %176 : vector<16x32xf32>
    %cst_40 = arith.constant 9.99999974E-6 : f32
    %178 = vector.broadcast %cst_40 : f32 to vector<16x1xf32>
    %179 = arith.addf %175, %178 : vector<16x1xf32>
    %180 = math.rsqrt %179 : vector<16x1xf32>
    %181 = vector.broadcast %180 : vector<16x1xf32> to vector<16x32xf32>
    %182 = arith.mulf %177, %181 : vector<16x32xf32>
    %183 = vector.broadcast %110 : vector<1x32xf32> to vector<16x32xf32>
    %184 = arith.mulf %182, %183 : vector<16x32xf32>
    %185 = vector.broadcast %111 : vector<1x32xf32> to vector<16x32xf32>
    %186 = arith.addf %184, %185 : vector<16x32xf32>
    %187 = vector.broadcast %7 : vector<16x1xf32> to vector<16x32xf32>
    %188 = arith.mulf %186, %187 : vector<16x32xf32>
    %189 = tpu.concatenate %104, %188 in 0 : vector<16x32xf32>, vector<16x32xf32> -> vector<32x32xf32>
    %190 = arith.truncf %189 : vector<32x32xf32> to vector<32x32xbf16>
    %c0_41 = arith.constant 0 : index
    %c0_42 = arith.constant 0 : index
    %191 = vector.load %arg5[%c0_41, %c0_42] : memref<32x128xbf16, #tpu.memory_space<vmem>>, vector<32x128xbf16>
    %cst_43 = arith.constant dense<0.000000e+00> : vector<32x128xf32>
    %192 = tpu.matmul %190, %191, %cst_43 {dimension_numbers = #tpu.dot_dimension_numbers<[1], [0], [0], [1], [0, 0, 1, 1], [], []>} : vector<32x32xbf16>, vector<32x128xbf16>, vector<32x128xf32> -> vector<32x128xf32>
    %193 = vector.extract_strided_slice %3 {offsets = [0, 5, 0], sizes = [1, 1, 64], strides = [1, 1, 1]} : vector<2x9x64xf32> to vector<1x1x64xf32>
    %194 = vector.shape_cast %193 : vector<1x1x64xf32> to vector<1x64xf32>
    %195 = vector.extract_strided_slice %3 {offsets = [1, 5, 0], sizes = [1, 1, 64], strides = [1, 1, 1]} : vector<2x9x64xf32> to vector<1x1x64xf32>
    %196 = vector.shape_cast %195 : vector<1x1x64xf32> to vector<1x64xf32>
    %197 = tpu.concatenate %194, %196 in 1 : vector<1x64xf32>, vector<1x64xf32> -> vector<1x128xf32>
    %198 = tpu.iota {dimensions = array<i32: 0>} : vector<32x128xi32>
    %199 = tpu.iota {dimensions = array<i32: 1>} : vector<32x128xi32>
    %c16_i32 = arith.constant 16 : i32
    %200 = vector.broadcast %c16_i32 : i32 to vector<32x128xi32>
    %201 = arith.cmpi slt, %198, %200 : vector<32x128xi32>
    %c64_i32 = arith.constant 64 : i32
    %202 = vector.broadcast %c64_i32 : i32 to vector<32x128xi32>
    %203 = arith.cmpi sge, %199, %202 : vector<32x128xi32>
    %204 = arith.xori %201, %203 : vector<32x128xi1>
    %205 = vector.broadcast %197 : vector<1x128xf32> to vector<32x128xf32>
    %206 = arith.addf %192, %205 : vector<32x128xf32>
    %cst_44 = arith.constant 0.000000e+00 : f32
    %207 = vector.broadcast %cst_44 : f32 to vector<32x128xf32>
    %208 = arith.maximumf %206, %207 : vector<32x128xf32>
    %cst_45 = arith.constant 0.000000e+00 : f32
    %209 = vector.broadcast %cst_45 : f32 to vector<32x128xf32>
    %210 = arith.select %204, %208, %209 : vector<32x128xi1>, vector<32x128xf32>
    %211 = arith.truncf %210 : vector<32x128xf32> to vector<32x128xbf16>
    %c0_46 = arith.constant 0 : index
    %c0_47 = arith.constant 0 : index
    %212 = vector.load %arg6[%c0_46, %c0_47] : memref<128x32xbf16, #tpu.memory_space<vmem>>, vector<128x32xbf16>
    %cst_48 = arith.constant dense<0.000000e+00> : vector<32x32xf32>
    %213 = tpu.matmul %211, %212, %cst_48 {dimension_numbers = #tpu.dot_dimension_numbers<[1], [0], [0], [1], [0, 0, 1, 1], [], []>} : vector<32x128xbf16>, vector<128x32xbf16>, vector<32x32xf32> -> vector<32x32xf32>
    %214 = vector.extract_strided_slice %3 {offsets = [0, 0, 0], sizes = [1, 9, 64], strides = [1, 1, 1]} : vector<2x9x64xf32> to vector<1x9x64xf32>
    %215 = vector.shape_cast %214 : vector<1x9x64xf32> to vector<9x64xf32>
    %216 = vector.extract_strided_slice %215 {offsets = [6, 0], sizes = [1, 32], strides = [1, 1]} : vector<9x64xf32> to vector<1x32xf32>
    %217 = vector.extract_strided_slice %215 {offsets = [7, 0], sizes = [1, 32], strides = [1, 1]} : vector<9x64xf32> to vector<1x32xf32>
    %218 = vector.extract_strided_slice %215 {offsets = [8, 0], sizes = [1, 32], strides = [1, 1]} : vector<9x64xf32> to vector<1x32xf32>
    %219 = vector.extract_strided_slice %213 {offsets = [0, 0], sizes = [16, 32], strides = [1, 1]} : vector<32x32xf32> to vector<16x32xf32>
    %220 = vector.broadcast %216 : vector<1x32xf32> to vector<16x32xf32>
    %221 = arith.addf %219, %220 : vector<16x32xf32>
    %222 = arith.addf %221, %104 : vector<16x32xf32>
    %cst_49 = arith.constant dense<0.000000e+00> : vector<16xf32>
    %223 = vector.multi_reduction <add>, %222, %cst_49 [1] : vector<16x32xf32> to vector<16xf32>
    %224 = vector.shape_cast %223 : vector<16xf32> to vector<16x1xf32>
    %cst_50 = arith.constant 3.200000e+01 : f32
    %225 = vector.broadcast %cst_50 : f32 to vector<16x1xf32>
    %226 = arith.divf %224, %225 : vector<16x1xf32>
    %227 = vector.broadcast %226 : vector<16x1xf32> to vector<16x32xf32>
    %228 = arith.subf %222, %227 : vector<16x32xf32>
    %229 = arith.mulf %228, %228 : vector<16x32xf32>
    %cst_51 = arith.constant dense<0.000000e+00> : vector<16xf32>
    %230 = vector.multi_reduction <add>, %229, %cst_51 [1] : vector<16x32xf32> to vector<16xf32>
    %231 = vector.shape_cast %230 : vector<16xf32> to vector<16x1xf32>
    %cst_52 = arith.constant 3.200000e+01 : f32
    %232 = vector.broadcast %cst_52 : f32 to vector<16x1xf32>
    %233 = arith.divf %231, %232 : vector<16x1xf32>
    %234 = vector.broadcast %226 : vector<16x1xf32> to vector<16x32xf32>
    %235 = arith.subf %222, %234 : vector<16x32xf32>
    %cst_53 = arith.constant 9.99999974E-6 : f32
    %236 = vector.broadcast %cst_53 : f32 to vector<16x1xf32>
    %237 = arith.addf %233, %236 : vector<16x1xf32>
    %238 = math.rsqrt %237 : vector<16x1xf32>
    %239 = vector.broadcast %238 : vector<16x1xf32> to vector<16x32xf32>
    %240 = arith.mulf %235, %239 : vector<16x32xf32>
    %241 = vector.broadcast %217 : vector<1x32xf32> to vector<16x32xf32>
    %242 = arith.mulf %240, %241 : vector<16x32xf32>
    %243 = vector.broadcast %218 : vector<1x32xf32> to vector<16x32xf32>
    %244 = arith.addf %242, %243 : vector<16x32xf32>
    %245 = vector.broadcast %7 : vector<16x1xf32> to vector<16x32xf32>
    %246 = arith.mulf %244, %245 : vector<16x32xf32>
    %247 = vector.extract_strided_slice %3 {offsets = [1, 0, 0], sizes = [1, 9, 64], strides = [1, 1, 1]} : vector<2x9x64xf32> to vector<1x9x64xf32>
    %248 = vector.shape_cast %247 : vector<1x9x64xf32> to vector<9x64xf32>
    %249 = vector.extract_strided_slice %248 {offsets = [6, 0], sizes = [1, 32], strides = [1, 1]} : vector<9x64xf32> to vector<1x32xf32>
    %250 = vector.extract_strided_slice %248 {offsets = [7, 0], sizes = [1, 32], strides = [1, 1]} : vector<9x64xf32> to vector<1x32xf32>
    %251 = vector.extract_strided_slice %248 {offsets = [8, 0], sizes = [1, 32], strides = [1, 1]} : vector<9x64xf32> to vector<1x32xf32>
    %252 = vector.extract_strided_slice %213 {offsets = [16, 0], sizes = [16, 32], strides = [1, 1]} : vector<32x32xf32> to vector<16x32xf32>
    %253 = vector.broadcast %249 : vector<1x32xf32> to vector<16x32xf32>
    %254 = arith.addf %252, %253 : vector<16x32xf32>
    %255 = arith.addf %254, %188 : vector<16x32xf32>
    %cst_54 = arith.constant dense<0.000000e+00> : vector<16xf32>
    %256 = vector.multi_reduction <add>, %255, %cst_54 [1] : vector<16x32xf32> to vector<16xf32>
    %257 = vector.shape_cast %256 : vector<16xf32> to vector<16x1xf32>
    %cst_55 = arith.constant 3.200000e+01 : f32
    %258 = vector.broadcast %cst_55 : f32 to vector<16x1xf32>
    %259 = arith.divf %257, %258 : vector<16x1xf32>
    %260 = vector.broadcast %259 : vector<16x1xf32> to vector<16x32xf32>
    %261 = arith.subf %255, %260 : vector<16x32xf32>
    %262 = arith.mulf %261, %261 : vector<16x32xf32>
    %cst_56 = arith.constant dense<0.000000e+00> : vector<16xf32>
    %263 = vector.multi_reduction <add>, %262, %cst_56 [1] : vector<16x32xf32> to vector<16xf32>
    %264 = vector.shape_cast %263 : vector<16xf32> to vector<16x1xf32>
    %cst_57 = arith.constant 3.200000e+01 : f32
    %265 = vector.broadcast %cst_57 : f32 to vector<16x1xf32>
    %266 = arith.divf %264, %265 : vector<16x1xf32>
    %267 = vector.broadcast %259 : vector<16x1xf32> to vector<16x32xf32>
    %268 = arith.subf %255, %267 : vector<16x32xf32>
    %cst_58 = arith.constant 9.99999974E-6 : f32
    %269 = vector.broadcast %cst_58 : f32 to vector<16x1xf32>
    %270 = arith.addf %266, %269 : vector<16x1xf32>
    %271 = math.rsqrt %270 : vector<16x1xf32>
    %272 = vector.broadcast %271 : vector<16x1xf32> to vector<16x32xf32>
    %273 = arith.mulf %268, %272 : vector<16x32xf32>
    %274 = vector.broadcast %250 : vector<1x32xf32> to vector<16x32xf32>
    %275 = arith.mulf %273, %274 : vector<16x32xf32>
    %276 = vector.broadcast %251 : vector<1x32xf32> to vector<16x32xf32>
    %277 = arith.addf %275, %276 : vector<16x32xf32>
    %278 = vector.broadcast %7 : vector<16x1xf32> to vector<16x32xf32>
    %279 = arith.mulf %277, %278 : vector<16x32xf32>
    %280 = tpu.concatenate %246, %279 in 0 : vector<16x32xf32>, vector<16x32xf32> -> vector<32x32xf32>
    %c0_59 = arith.constant 0 : index
    %c0_60 = arith.constant 0 : index
    %281 = vector.load %arg8[%c0_59, %c0_60] : memref<32x32xf32, #tpu.memory_space<vmem>>, vector<32x32xf32>
    tpu.vector_store %arg8[%c0_59, %c0_60], %280 {strides = array<i32>} : memref<32x32xf32, #tpu.memory_space<vmem>>, vector<32x32xf32>,
    return
  }
  func.func @transform_0(%arg0: i32) -> (i32, i32) {
    %c0_i32 = arith.constant 0 : i32
    %c0_i32_0 = arith.constant 0 : i32
    %c0_i32_1 = arith.constant 0 : i32
    return %c0_i32, %c0_i32_0 : i32, i32
  }
  func.func @transform_1(%arg0: i32) -> (i32, i32) {
    %c0_i32 = arith.constant 0 : i32
    %c0_i32_0 = arith.constant 0 : i32
    %c0_i32_1 = arith.constant 0 : i32
    return %c0_i32, %c0_i32_0 : i32, i32
  }
  func.func @transform_2(%arg0: i32) -> (i32, i32) {
    %c0_i32 = arith.constant 0 : i32
    %c0_i32_0 = arith.constant 0 : i32
    %c0_i32_1 = arith.constant 0 : i32
    return %c0_i32, %c0_i32_0 : i32, i32
  }
  func.func @transform_3(%arg0: i32) -> (i32, i32) {
    %c0_i32 = arith.constant 0 : i32
    %c0_i32_0 = arith.constant 0 : i32
    %c0_i32_1 = arith.constant 0 : i32
    return %c0_i32, %c0_i32_0 : i32, i32
  }
  func.func @transform_4(%arg0: i32) -> (i32, i32) {
    %c0_i32 = arith.constant 0 : i32
    %c0_i32_0 = arith.constant 0 : i32
    %c0_i32_1 = arith.constant 0 : i32
    return %c0_i32, %c0_i32_0 : i32, i32
  }
  func.func @transform_5(%arg0: i32) -> (i32, i32) {
    %c0_i32 = arith.constant 0 : i32
    %c0_i32_0 = arith.constant 0 : i32
    %c0_i32_1 = arith.constant 0 : i32
    return %c0_i32, %c0_i32_0 : i32, i32
  }
  func.func @transform_6(%arg0: i32) -> (i32, i32, i32) {
    %c0_i32 = arith.constant 0 : i32
    %c0_i32_0 = arith.constant 0 : i32
    %c0_i32_1 = arith.constant 0 : i32
    %c0_i32_2 = arith.constant 0 : i32
    return %c0_i32, %c0_i32_0, %c0_i32_1 : i32, i32, i32
  }
  func.func @transform_7(%arg0: i32) -> (i32, i32) {
    %c0_i32 = arith.constant 0 : i32
    %c0_i32_0 = arith.constant 0 : i32
    %c0_i32_1 = arith.constant 0 : i32
    return %c0_i32, %c0_i32_0 : i32, i32
  }
}

</mosaic_0001>

<llo_original>
// kernel: fwd.1
$region0: #{fwd.1}
  #allocation0 [shape = 'u32[]', space=smem, size = 0x4, offset = 0x4, fixed_abs, tag = 'smem constant byte address 0x4 - core index']
  #allocation1 [shape = 'u32[72,128]{1,0:T(1,128)}', space=vmem, size = 0x9000, scoped, tag = 'internal scratch']
  %s0 = inlined_call_operand.vmem [shape: f32[32,32], index: 0, kind: input, shape index: {}]
  %s1 = inlined_call_operand.vmem [shape: f32[2,16], index: 1, kind: input, shape index: {}]
  %s2 = inlined_call_operand.hbm [shape: f32[16,2], index: 2, kind: input, shape index: {}]
  %s3 = inlined_call_operand.vmem [shape: bf16[32,192], index: 3, kind: input, shape index: {}]
  %s4 = inlined_call_operand.hbm [shape: bf16[32,128], index: 4, kind: input, shape index: {}]
  %s5 = inlined_call_operand.vmem [shape: bf16[128,32], index: 5, kind: input, shape index: {}]
  %s6 = inlined_call_operand.hbm [shape: f32[2,9,64], index: 6, kind: input, shape index: {}]
  %s7 = inlined_call_operand.vmem [shape: f32[32,32], index: 7, kind: output, shape index: {}]
  %s8 = sld [smem:[#allocation0]]
  $region50: #{fwd.1} parent=0
    _
  %s10 = ssub.s32 1, %s8
  %s11 = scalar_select 0, %s10, %s8
  $region1: #{fwd.1} parent=0
    #allocation2 [shape = 'u8[8192]{0}', space=vmem, size = 0x2000, scoped, tag = 'input window, operand 2, single buffered']
    #allocation3 [shape = 's32[1]{0}', space=sflag, size = 0x4, scoped, tag = 'scoped memory for fwd.1']
    #allocation4 [shape = 'u8[8192]{0}', space=vmem, size = 0x2000, scoped, tag = 'input window, operand 4, single buffered']
    #allocation5 [shape = 's32[1]{0}', space=sflag, size = 0x4, scoped, tag = 'scoped memory for fwd.1']
    #allocation6 [shape = 'u8[16384]{0}', space=vmem, size = 0x4000, scoped, tag = 'input window, operand 6, single buffered']
    %12 = vsyncpa [#allocation3], 0
    %13 = vsyncpa [#allocation5], 0
    // Predicated region
    $region2: #{fwd.1} parent=1 // pred_check
      _
    $region3: #{fwd.1} parent=1 // pred_check_branch
      %15 = sbr.rel (0) target = $region5
    $region4: #{fwd.1} parent=1 // pred_region
      _
    $region5: #{fwd.1} parent=1 // pred_fallthru
      _
    // Predicated region
    $region6: #{fwd.1} parent=1 // pred_check
      _
    $region7: #{fwd.1} parent=1 // pred_check_branch
      %17 = sbr.rel (0) target = $region9
    $region8: #{fwd.1} parent=1 // pred_region
      _
    $region9: #{fwd.1} parent=1 // pred_fallthru
      _
    // Predicated region
    $region10: #{fwd.1} parent=1 // pred_check
      _
    $region11: #{fwd.1} parent=1 // pred_check_branch
      %19 = sbr.rel (0) target = $region13
    $region12: #{fwd.1} parent=1 // pred_region
      %21 = vsyncadd [#allocation3], 0
      %s22 = sshll.u32 %s2, 4
      %s23 = int_to_ptr.hbm [resolvable:$true] %s22
      %s24 = sshll.u32 [#allocation2], 4
      %s25 = int_to_ptr.vmem [resolvable:$true] %s24
      %30 = dma.hbm_to_vmem [thread:$0]  %s23, 256, %s25, [#allocation3], 128, 128, 8
    $region13: #{fwd.1} parent=1 // pred_fallthru
      _
    // Predicated region
    $region14: #{fwd.1} parent=1 // pred_check
      _
    $region15: #{fwd.1} parent=1 // pred_check_branch
      %32 = sbr.rel (0) target = $region17
    $region16: #{fwd.1} parent=1 // pred_region
      _
    $region17: #{fwd.1} parent=1 // pred_fallthru
      _
    // Predicated region
    $region18: #{fwd.1} parent=1 // pred_check
      _
    $region19: #{fwd.1} parent=1 // pred_check_branch
      %34 = sbr.rel (0) target = $region21
    $region20: #{fwd.1} parent=1 // pred_region
      %36 = vsyncadd [#allocation5], 0
      %s37 = sshll.u32 %s4, 4
      %s38 = int_to_ptr.hbm [resolvable:$true] %s37
      %s39 = sshll.u32 [#allocation4], 4
      %s40 = int_to_ptr.vmem [resolvable:$true] %s39
      %45 = dma.hbm_to_vmem [thread:$0]  %s38, 256, %s40, [#allocation5], 64, 64, 4
    $region21: #{fwd.1} parent=1 // pred_fallthru
      _
    // Predicated region
    $region22: #{fwd.1} parent=1 // pred_check
      _
    $region23: #{fwd.1} parent=1 // pred_check_branch
      %47 = sbr.rel (0) target = $region25
    $region24: #{fwd.1} parent=1 // pred_region
      _
    $region25: #{fwd.1} parent=1 // pred_fallthru
      _
    // Predicated region
    $region26: #{fwd.1} parent=1 // pred_check
      _
    $region27: #{fwd.1} parent=1 // pred_check_branch
      %49 = sbr.rel (0) target = $region29
    $region28: #{fwd.1} parent=1 // pred_region
      %51 = vsyncadd [#allocation5], 0
      %s52 = sshll.u32 %s6, 4
      %s53 = int_to_ptr.hbm [resolvable:$true] %s52
      %s54 = sshll.u32 [#allocation6], 4
      %s55 = int_to_ptr.vmem [resolvable:$true] %s54
      %60 = dma.hbm_to_vmem [thread:$0]  %s53, 512, %s55, [#allocation5], 128, 128, 8
    $region29: #{fwd.1} parent=1 // pred_fallthru
      _
    // Predicated region
    $region30: #{fwd.1} parent=1 // pred_check
      _
    $region31: #{fwd.1} parent=1 // pred_check_branch
      %62 = sbr.rel (0) target = $region33
    $region32: #{fwd.1} parent=1 // pred_region
      %64 = dma.done [#allocation3], 256
    $region33: #{fwd.1} parent=1 // pred_fallthru
      _
    // Predicated region
    $region34: #{fwd.1} parent=1 // pred_check
      _
    $region35: #{fwd.1} parent=1 // pred_check_branch
      %66 = sbr.rel (0) target = $region37
    $region36: #{fwd.1} parent=1 // pred_region
      %68 = dma.done [#allocation5], 256
    $region37: #{fwd.1} parent=1 // pred_fallthru
      _
    // Predicated region
    $region38: #{fwd.1} parent=1 // pred_check
      _
    $region39: #{fwd.1} parent=1 // pred_check_branch
      %70 = sbr.rel (0) target = $region41
    $region40: #{fwd.1} parent=1 // pred_region
      %72 = dma.done [#allocation5], 512
    $region41: #{fwd.1} parent=1 // pred_fallthru
      _
    %v74 = vld [vmem:[%s0] sm:$0xff]
    %v75 = vld [vmem:[%s0 + $0x8] sm:$0xff]
    %v76 = vld [vmem:[%s0 + $0x10] sm:$0xff]
    %v77 = vld [vmem:[%s0 + $0x18] sm:$0xff]
    %v78 = vld [vmem:[%s1] sm:$0x3]
    %v79 = vld [vmem:[#allocation2] sm:$0xff]
    %v80 = vld [vmem:[#allocation2 + $0x8] sm:$0xff]
    %v81 = vld [vmem:[#allocation6] sm:$0xff]
    %v82 = vld [vmem:[#allocation6 + $0x8] sm:$0x1]
    %v83 = vld [vmem:[#allocation6 + $0x10] sm:$0xff]
    %v84 = vld [vmem:[#allocation6 + $0x18] sm:$0x1]
    %86 = vset.pattern.permute.xlu0 0
    %87 = vperm.xlu0 %86, %v79
    %v88 = vpop.permute.xlu0 %87
    %91 = vset.pattern.permute.xlu0 0
    %92 = vperm.xlu0 %91, %v80
    %v93 = vpop.permute.xlu0 %92
    %v95 = vperm.slane %v78, 0
    %vm96 = vcmp.eq.f32.partialorder %v88, %v95
    %vm97 = vcmp.eq.f32.partialorder %v93, %v95
    %vm98 = vcmp.gt.f32.partialorder %v78, 0.5
    %v99 = vsel %vm98, 1, 0
    %v100 = vperm.slane %v99, 1
    %vm101 = vcmp.eq.s32.totalorder %v100, 1
    %vm102 = vmand %vm96, %vm101
    %vm103 = vmand %vm97, %vm101
    %v104 = vsel %vm102, 0.0, -1e+09
    %v105 = vsel %vm103, 0.0, -1e+09
    %v106 = vpack.c.bf16 %v75, %v74
    %v107 = vpack.c.bf16 %v77, %v76
    %v108 = vld [vmem:[%s3] sm:$0xff]
    %v109 = vld [vmem:[%s3 + $0x8] sm:$0xff]
    %v110 = vld [vmem:[%s3 + $0x10] sm:$0xff]
    %v111 = vld [vmem:[%s3 + $0x18] sm:$0xff]
    %v116 = vunpack.c.l.b16 %v108
    %v117 = vunpack.c.h.b16 %v108
    %v118 = vunpack.c.l.b16 %v109
    %v119 = vunpack.c.h.b16 %v109
    %v120 = vunpack.c.l.b16 %v110
    %v121 = vunpack.c.h.b16 %v110
    %v122 = vunpack.c.l.b16 %v111
    %v123 = vunpack.c.h.b16 %v111
    %v124 = vpack.c.b16 %v118, %v116
    %v125 = vpack.c.b16 %v119, %v117
    %v126 = vpack.c.b16 %v122, %v120
    %v127 = vpack.c.b16 %v123, %v121
    %vm132 = vcmask 261120
    %v134 = vsel %vm132, %v106, 0
    %v137 = vsel %vm132, %v107, 0
    %139 = vmatpush.bf16.msra.mxu0 0
    %140 = vmatpush.bf16.msra.mxu0 0
    %141 = vmatpush.bf16.msra.mxu0 0
    %142 = vmatpush.bf16.msra.mxu0 0
    %143 = vmatpush.bf16.msra.mxu0 0
    %144 = vmatpush.bf16.msra.mxu0 0
    %145 = vmatpush.bf16.msra.mxu0 %v126
    %146 = vmatpush.bf16.msra.mxu0 %v124
    %147 = vmatmul.bf16.gmra.mxu0 %v134
    %v148 = vpop.f32.mrf.mxu0
    %v149 = vadd.f32 0.0, %v148
    %v150 = vpop.f32.mrf.mxu0
    %v151 = vadd.f32 0.0, %v150
    %152 = vmatmul.bf16.gmra.mxu0 %v137
    %v153 = vpop.f32.mrf.mxu0
    %v154 = vadd.f32 0.0, %v153
    %v155 = vpop.f32.mrf.mxu0
    %v156 = vadd.f32 0.0, %v155
    %157 = vdwg.mxu0
    %158 = vmatpush.bf16.msra.mxu0 0
    %159 = vmatpush.bf16.msra.mxu0 0
    %160 = vmatpush.bf16.msra.mxu0 0
    %161 = vmatpush.bf16.msra.mxu0 0
    %162 = vmatpush.bf16.msra.mxu0 0
    %163 = vmatpush.bf16.msra.mxu0 0
    %164 = vmatpush.bf16.msra.mxu0 %v127
    %165 = vmatpush.bf16.msra.mxu0 %v125
    %166 = vmatmul.bf16.gmra.mxu0 %v134
    %v167 = vpop.f32.mrf.mxu0
    %v168 = vadd.f32 0.0, %v167
    %v169 = vpop.f32.mrf.mxu0
    %v170 = vadd.f32 0.0, %v169
    %171 = vmatmul.bf16.gmra.mxu0 %v137
    %v172 = vpop.f32.mrf.mxu0
    %v173 = vpop.f32.mrf.mxu0
    %174 = vdwg.mxu0
    %v175 = vperm.slane %v81, 0
    %v176 = vadd.f32 %v149, %v175
    %v177 = vadd.f32 %v151, %v175
    %v178 = vperm.slane %v81, 1
    %180 = vrot.lane.b32.xlu0 %v178, 16
    %v181 = vpop.permute.xlu0 %180
    %v183 = vadd.f32 %v154, %v181
    %v184 = vadd.f32 %v156, %v181
    %v185 = vpack.c.bf16 %v177, %v176
    %v186 = vpack.c.bf16 %v184, %v183
    %188 = vrot.lane.b32.xlu0 %v186, 112
    %v189 = vpop.permute.xlu0 %188
    %vm190 = vcmask 64512
    %v192 = vsel %vm190, %v185, 0
    %v195 = vsel %vm190, %v189, 0
    %197 = vmatpush.bf16.xpose.msra.mxu0 0
    %198 = vmatpush.bf16.xpose.msra.mxu0 0
    %199 = vmatpush.bf16.xpose.msra.mxu0 0
    %200 = vmatpush.bf16.xpose.msra.mxu0 0
    %201 = vmatpush.bf16.xpose.msra.mxu0 0
    %202 = vmatpush.bf16.xpose.msra.mxu0 0
    %203 = vmatpush.bf16.xpose.msra.mxu0 0
    %204 = vmatpush.bf16.xpose.msra.mxu0 %v195
    %205 = vmatmul.bf16.gmra.mxu0 %v192
    %v206 = vpop.f32.mrf.mxu0
    %v207 = vadd.f32 %v104, %v206
    %v208 = vpop.f32.mrf.mxu0
    %v209 = vadd.f32 %v105, %v208
    %210 = vdwg.mxu0
    %vm211 = vcmask 130048
    %v212 = vsel %vm211, %v207, -inf
    %213 = vmax.xlane.f32.xlu0 %v212
    %v214 = vpop.xlane.xlu0 %213
    %v215 = vsel %vm211, %v209, -inf
    %216 = vmax.xlane.f32.xlu0 %v215
    %v217 = vpop.xlane.xlu0 %216
    %v218 = vsub.f32 %v207, %v214
    %v219 = vsub.f32 %v209, %v217
    %v220 = vmul.f32 %v218, 1.442695
    %v221 = vpow.pop %v220
    %v222 = vmul.f32 %v219, 1.442695
    %v223 = vpow.pop %v222
    %v224 = vsel %vm211, %v221, 0.0
    %225 = vadd.xlane.f32.xlu0 %v224
    %v226 = vpop.xlane.xlu0 %225
    %v227 = vsel %vm211, %v223, 0.0
    %228 = vadd.xlane.f32.xlu0 %v227
    %v229 = vpop.xlane.xlu0 %228
    %v230 = vrcp.pop %v226
    %v231 = vrcp.pop %v229
    %v232 = vmul.f32 %v221, %v230
    %v233 = vmul.f32 %v223, %v231
    %v234 = vpack.c.bf16 %v233, %v232
    %v235 = vpack.c.bf16 %v156, %v154
    %237 = vrot.lane.b32.xlu0 %v185, 120
    %v238 = vpop.permute.xlu0 %237
    %239 = vrot.lane.b32.xlu0 %v186, 104
    %v240 = vpop.permute.xlu0 %239
    %v242 = vsel %vm190, %v238, 0
    %v245 = vsel %vm190, %v240, 0
    %247 = vmatpush.bf16.xpose.msra.mxu0 0
    %248 = vmatpush.bf16.xpose.msra.mxu0 0
    %249 = vmatpush.bf16.xpose.msra.mxu0 0
    %250 = vmatpush.bf16.xpose.msra.mxu0 0
    %251 = vmatpush.bf16.xpose.msra.mxu0 0
    %252 = vmatpush.bf16.xpose.msra.mxu0 0
    %253 = vmatpush.bf16.xpose.msra.mxu0 0
    %254 = vmatpush.bf16.xpose.msra.mxu0 %v245
    %255 = vmatmul.bf16.gmra.mxu0 %v242
    %v256 = vpop.f32.mrf.mxu0
    %v257 = vadd.f32 %v104, %v256
    %v258 = vpop.f32.mrf.mxu0
    %v259 = vadd.f32 %v105, %v258
    %260 = vdwg.mxu0
    %v261 = vsel %vm211, %v257, -inf
    %262 = vmax.xlane.f32.xlu0 %v261
    %v263 = vpop.xlane.xlu0 %262
    %v264 = vsel %vm211, %v259, -inf
    %265 = vmax.xlane.f32.xlu0 %v264
    %v266 = vpop.xlane.xlu0 %265
    %v267 = vsub.f32 %v257, %v263
    %v268 = vsub.f32 %v259, %v266
    %v269 = vmul.f32 %v267, 1.442695
    %v270 = vpow.pop %v269
    %v271 = vmul.f32 %v268, 1.442695
    %v272 = vpow.pop %v271
    %v273 = vsel %vm211, %v270, 0.0
    %274 = vadd.xlane.f32.xlu0 %v273
    %v275 = vpop.xlane.xlu0 %274
    %v276 = vsel %vm211, %v272, 0.0
    %277 = vadd.xlane.f32.xlu0 %v276
    %v278 = vpop.xlane.xlu0 %277
    %v279 = vrcp.pop %v275
    %v280 = vrcp.pop %v278
    %v281 = vmul.f32 %v270, %v279
    %v282 = vmul.f32 %v272, %v280
    %v283 = vpack.c.bf16 %v282, %v281
    %285 = vrot.lane.b32.xlu0 %v235, 64
    %v286 = vpop.permute.xlu0 %285
    %v289 = vsel %vm211, %v283, 0
    %291 = vmatpush.bf16.msra.mxu0 0
    %292 = vmatpush.bf16.msra.mxu0 0
    %293 = vmatpush.bf16.msra.mxu0 0
    %294 = vmatpush.bf16.msra.mxu0 0
    %295 = vmatpush.bf16.msra.mxu0 0
    %296 = vmatpush.bf16.msra.mxu0 0
    %297 = vmatpush.bf16.msra.mxu0 0
    %298 = vmatpush.bf16.msra.mxu0 %v286
    %299 = vmatmul.bf16.gmra.mxu0 %v289
    %v300 = vpop.f32.mrf.mxu0
    %v301 = vadd.f32 0.0, %v300
    %v302 = vpop.f32.mrf.mxu0
    %v303 = vadd.f32 0.0, %v302
    %304 = vdwg.mxu0
    %305 = vrot.lane.b32.xlu0 %v235, 96
    %v306 = vpop.permute.xlu0 %305
    %v309 = vsel %vm211, %v234, 0
    %311 = vmatpush.bf16.msra.mxu0 0
    %312 = vmatpush.bf16.msra.mxu0 0
    %313 = vmatpush.bf16.msra.mxu0 0
    %314 = vmatpush.bf16.msra.mxu0 0
    %315 = vmatpush.bf16.msra.mxu0 0
    %316 = vmatpush.bf16.msra.mxu0 0
    %317 = vmatpush.bf16.msra.mxu0 0
    %318 = vmatpush.bf16.msra.mxu0 %v306
    %319 = vmatmul.bf16.gmra.mxu0 %v309
    %v320 = vpop.f32.mrf.mxu0
    %v321 = vadd.f32 %v301, %v320
    %v322 = vpop.f32.mrf.mxu0
    %v323 = vadd.f32 %v303, %v322
    %324 = vdwg.mxu0
    %v325 = vperm.slane %v81, 2
    %v326 = vadd.f32 %v321, %v325
    %v327 = vadd.f32 %v323, %v325
    %v328 = vadd.f32 %v326, %v74
    %v329 = vadd.f32 %v327, %v75
    %v330 = vsel %vm132, %v328, 0.0
    %331 = vadd.xlane.f32.xlu0 %v330
    %v332 = vpop.xlane.xlu0 %331
    %v333 = vsel %vm132, %v329, 0.0
    %334 = vadd.xlane.f32.xlu0 %v333
    %v335 = vpop.xlane.xlu0 %334
    %v336 = vrcp.pop 32.0
    %v337 = vmul.f32 32.0, %v336
    %v338 = vsub.f32 1.0, %v337
    %v339 = vmul.f32 %v336, %v338
    %v340 = vadd.f32 %v336, %v339
    %vm341 = vweird.f32 %v336
    %v342 = vsel %vm341, %v336, %v340
    %v343 = vmul.f32 %v332, %v342
    %v344 = vmul.f32 %v335, %v342
    %v345 = vsub.f32 %v328, %v343
    %v346 = vsub.f32 %v329, %v344
    %v347 = vmul.f32 %v345, %v345
    %v348 = vmul.f32 %v346, %v346
    %v349 = vsel %vm132, %v347, 0.0
    %350 = vadd.xlane.f32.xlu0 %v349
    %v351 = vpop.xlane.xlu0 %350
    %v352 = vsel %vm132, %v348, 0.0
    %353 = vadd.xlane.f32.xlu0 %v352
    %v354 = vpop.xlane.xlu0 %353
    %v355 = vmul.f32 %v351, %v342
    %v356 = vmul.f32 %v354, %v342
    %v357 = vadd.f32 %v355, 1e-05
    %v358 = vadd.f32 %v356, 1e-05
    %v359 = vrsqrt.pop %v357
    %v360 = vmul.f32 %v359, %v357
    %v361 = vmul.f32 %v360, %v359
    %v362 = vmul.f32 0.5, %v361
    %v363 = vsub.f32 1.5, %v362
    %v364 = vmul.f32 %v359, %v363
    %vm365 = vweird.f32 %v357
    %vm366 = vweird.f32 %v359
    %vm367 = vmor %vm365, %vm366
    %v368 = vsel %vm367, %v359, %v364
    %v369 = vrsqrt.pop %v358
    %v370 = vmul.f32 %v369, %v358
    %v371 = vmul.f32 %v370, %v369
    %v372 = vmul.f32 0.5, %v371
    %v373 = vsub.f32 1.5, %v372
    %v374 = vmul.f32 %v369, %v373
    %vm375 = vweird.f32 %v358
    %vm376 = vweird.f32 %v369
    %vm377 = vmor %vm375, %vm376
    %v378 = vsel %vm377, %v369, %v374
    %v379 = vmul.f32 %v345, %v368
    %v380 = vmul.f32 %v346, %v378
    %v381 = vperm.slane %v81, 3
    %v382 = vmul.f32 %v379, %v381
    %v383 = vmul.f32 %v380, %v381
    %v384 = vperm.slane %v81, 4
    %v385 = vadd.f32 %v382, %v384
    %v386 = vadd.f32 %v383, %v384
    %387 = vset.pattern.permute.xlu0 1
    %388 = vperm.xlu0 %387, %v79
    %v389 = vpop.permute.xlu0 %388
    %391 = vset.pattern.permute.xlu0 1
    %392 = vperm.xlu0 %391, %v80
    %v393 = vpop.permute.xlu0 %392
    %v395 = vmul.f32 %v385, %v389
    %v396 = vmul.f32 %v386, %v393
    %v397 = vperm.slane %v83, 0
    %399 = vrot.lane.b32.xlu0 %v397, 96
    %v400 = vpop.permute.xlu0 %399
    %v402 = vadd.f32 %v154, %v400
    %v403 = vadd.f32 %v156, %v400
    %v404 = vperm.slane %v83, 1
    %406 = vrot.lane.b32.xlu0 %v404, 112
    %v407 = vpop.permute.xlu0 %406
    %v409 = vadd.f32 %v149, %v407
    %v410 = vadd.f32 %v151, %v407
    %v411 = vpack.c.bf16 %v403, %v402
    %v412 = vpack.c.bf16 %v410, %v409
    %414 = vrot.lane.b32.xlu0 %v411, 32
    %v415 = vpop.permute.xlu0 %414
    %417 = vrot.lane.b32.xlu0 %v412, 16
    %v418 = vpop.permute.xlu0 %417
    %v420 = vsel %vm190, %v415, 0
    %v423 = vsel %vm190, %v418, 0
    %425 = vmatpush.bf16.xpose.msra.mxu0 0
    %426 = vmatpush.bf16.xpose.msra.mxu0 0
    %427 = vmatpush.bf16.xpose.msra.mxu0 0
    %428 = vmatpush.bf16.xpose.msra.mxu0 0
    %429 = vmatpush.bf16.xpose.msra.mxu0 0
    %430 = vmatpush.bf16.xpose.msra.mxu0 0
    %431 = vmatpush.bf16.xpose.msra.mxu0 0
    %432 = vmatpush.bf16.xpose.msra.mxu0 %v423
    %433 = vmatmul.bf16.gmra.mxu0 %v420
    %v434 = vpop.f32.mrf.mxu0
    %v435 = vadd.f32 %v104, %v434
    %v436 = vpop.f32.mrf.mxu0
    %v437 = vadd.f32 %v105, %v436
    %438 = vdwg.mxu0
    %v439 = vsel %vm211, %v435, -inf
    %440 = vmax.xlane.f32.xlu0 %v439
    %v441 = vpop.xlane.xlu0 %440
    %v442 = vsel %vm211, %v437, -inf
    %443 = vmax.xlane.f32.xlu0 %v442
    %v444 = vpop.xlane.xlu0 %443
    %v445 = vsub.f32 %v435, %v441
    %v446 = vsub.f32 %v437, %v444
    %v447 = vmul.f32 %v445, 1.442695
    %v448 = vpow.pop %v447
    %v449 = vmul.f32 %v446, 1.442695
    %v450 = vpow.pop %v449
    %v451 = vsel %vm211, %v448, 0.0
    %452 = vadd.xlane.f32.xlu0 %v451
    %v453 = vpop.xlane.xlu0 %452
    %v454 = vsel %vm211, %v450, 0.0
    %455 = vadd.xlane.f32.xlu0 %v454
    %v456 = vpop.xlane.xlu0 %455
    %v457 = vrcp.pop %v453
    %v458 = vrcp.pop %v456
    %v459 = vmul.f32 %v448, %v457
    %v460 = vmul.f32 %v450, %v458
    %v461 = vpack.c.bf16 %v460, %v459
    %v462 = vpack.c.bf16 %v170, %v168
    %463 = vrot.lane.b32.xlu0 %v411, 24
    %v464 = vpop.permute.xlu0 %463
    %465 = vrot.lane.b32.xlu0 %v412, 8
    %v466 = vpop.permute.xlu0 %465
    %v468 = vsel %vm190, %v464, 0
    %v471 = vsel %vm190, %v466, 0
    %473 = vmatpush.bf16.xpose.msra.mxu0 0
    %474 = vmatpush.bf16.xpose.msra.mxu0 0
    %475 = vmatpush.bf16.xpose.msra.mxu0 0
    %476 = vmatpush.bf16.xpose.msra.mxu0 0
    %477 = vmatpush.bf16.xpose.msra.mxu0 0
    %478 = vmatpush.bf16.xpose.msra.mxu0 0
    %479 = vmatpush.bf16.xpose.msra.mxu0 0
    %480 = vmatpush.bf16.xpose.msra.mxu0 %v471
    %481 = vmatmul.bf16.gmra.mxu0 %v468
    %v482 = vpop.f32.mrf.mxu0
    %v483 = vadd.f32 %v104, %v482
    %v484 = vpop.f32.mrf.mxu0
    %v485 = vadd.f32 %v105, %v484
    %486 = vdwg.mxu0
    %v487 = vsel %vm211, %v483, -inf
    %488 = vmax.xlane.f32.xlu0 %v487
    %v489 = vpop.xlane.xlu0 %488
    %v490 = vsel %vm211, %v485, -inf
    %491 = vmax.xlane.f32.xlu0 %v490
    %v492 = vpop.xlane.xlu0 %491
    %v493 = vsub.f32 %v483, %v489
    %v494 = vsub.f32 %v485, %v492
    %v495 = vmul.f32 %v493, 1.442695
    %v496 = vpow.pop %v495
    %v497 = vmul.f32 %v494, 1.442695
    %v498 = vpow.pop %v497
    %v499 = vsel %vm211, %v496, 0.0
    %500 = vadd.xlane.f32.xlu0 %v499
    %v501 = vpop.xlane.xlu0 %500
    %v502 = vsel %vm211, %v498, 0.0
    %503 = vadd.xlane.f32.xlu0 %v502
    %v504 = vpop.xlane.xlu0 %503
    %v505 = vrcp.pop %v501
    %v506 = vrcp.pop %v504
    %v507 = vmul.f32 %v496, %v505
    %v508 = vmul.f32 %v498, %v506
    %v509 = vpack.c.bf16 %v508, %v507
    %511 = vrot.lane.b32.xlu0 %v462, 96
    %v512 = vpop.permute.xlu0 %511
    %v515 = vsel %vm211, %v509, 0
    %517 = vmatpush.bf16.msra.mxu0 0
    %518 = vmatpush.bf16.msra.mxu0 0
    %519 = vmatpush.bf16.msra.mxu0 0
    %520 = vmatpush.bf16.msra.mxu0 0
    %521 = vmatpush.bf16.msra.mxu0 0
    %522 = vmatpush.bf16.msra.mxu0 0
    %523 = vmatpush.bf16.msra.mxu0 0
    %524 = vmatpush.bf16.msra.mxu0 %v512
    %525 = vmatmul.bf16.gmra.mxu0 %v515
    %v526 = vpop.f32.mrf.mxu0
    %v527 = vadd.f32 0.0, %v526
    %v528 = vpop.f32.mrf.mxu0
    %v529 = vadd.f32 0.0, %v528
    %530 = vdwg.mxu0
    %v532 = vsel %vm211, %v461, 0
    %534 = vmatpush.bf16.msra.mxu0 0
    %535 = vmatpush.bf16.msra.mxu0 0
    %536 = vmatpush.bf16.msra.mxu0 0
    %537 = vmatpush.bf16.msra.mxu0 0
    %538 = vmatpush.bf16.msra.mxu0 0
    %539 = vmatpush.bf16.msra.mxu0 0
    %540 = vmatpush.bf16.msra.mxu0 0
    %541 = vmatpush.bf16.msra.mxu0 %v462
    %542 = vmatmul.bf16.gmra.mxu0 %v532
    %v543 = vpop.f32.mrf.mxu0
    %v544 = vadd.f32 %v527, %v543
    %v545 = vpop.f32.mrf.mxu0
    %v546 = vadd.f32 %v529, %v545
    %547 = vdwg.mxu0
    %v548 = vperm.slane %v83, 2
    %v549 = vadd.f32 %v544, %v548
    %v550 = vadd.f32 %v546, %v548
    %v551 = vadd.f32 %v549, %v76
    %v552 = vadd.f32 %v550, %v77
    %v553 = vsel %vm132, %v551, 0.0
    %554 = vadd.xlane.f32.xlu0 %v553
    %v555 = vpop.xlane.xlu0 %554
    %v556 = vsel %vm132, %v552, 0.0
    %557 = vadd.xlane.f32.xlu0 %v556
    %v558 = vpop.xlane.xlu0 %557
    %v559 = vmul.f32 %v555, %v342
    %v560 = vmul.f32 %v558, %v342
    %v561 = vsub.f32 %v551, %v559
    %v562 = vsub.f32 %v552, %v560
    %v563 = vmul.f32 %v561, %v561
    %v564 = vmul.f32 %v562, %v562
    %v565 = vsel %vm132, %v563, 0.0
    %566 = vadd.xlane.f32.xlu0 %v565
    %v567 = vpop.xlane.xlu0 %566
    %v568 = vsel %vm132, %v564, 0.0
    %569 = vadd.xlane.f32.xlu0 %v568
    %v570 = vpop.xlane.xlu0 %569
    %v571 = vmul.f32 %v567, %v342
    %v572 = vmul.f32 %v570, %v342
    %v573 = vadd.f32 %v571, 1e-05
    %v574 = vadd.f32 %v572, 1e-05
    %v575 = vrsqrt.pop %v573
    %v576 = vmul.f32 %v575, %v573
    %v577 = vmul.f32 %v576, %v575
    %v578 = vmul.f32 0.5, %v577
    %v579 = vsub.f32 1.5, %v578
    %v580 = vmul.f32 %v575, %v579
    %vm581 = vweird.f32 %v573
    %vm582 = vweird.f32 %v575
    %vm583 = vmor %vm581, %vm582
    %v584 = vsel %vm583, %v575, %v580
    %v585 = vrsqrt.pop %v574
    %v586 = vmul.f32 %v585, %v574
    %v587 = vmul.f32 %v586, %v585
    %v588 = vmul.f32 0.5, %v587
    %v589 = vsub.f32 1.5, %v588
    %v590 = vmul.f32 %v585, %v589
    %vm591 = vweird.f32 %v574
    %vm592 = vweird.f32 %v585
    %vm593 = vmor %vm591, %vm592
    %v594 = vsel %vm593, %v585, %v590
    %v595 = vmul.f32 %v561, %v584
    %v596 = vmul.f32 %v562, %v594
    %v597 = vperm.slane %v83, 3
    %v598 = vmul.f32 %v595, %v597
    %v599 = vmul.f32 %v596, %v597
    %v600 = vperm.slane %v83, 4
    %v601 = vadd.f32 %v598, %v600
    %v602 = vadd.f32 %v599, %v600
    %v603 = vmul.f32 %v601, %v389
    %v604 = vmul.f32 %v602, %v393
    %v605 = vpack.c.bf16 %v396, %v395
    %v606 = vpack.c.bf16 %v604, %v603
    %v607 = vld [vmem:[#allocation4] sm:$0xf]
    %v608 = vld [vmem:[#allocation4 + $0x4] sm:$0xf]
    %v609 = vld [vmem:[#allocation4 + $0x8] sm:$0xf]
    %v610 = vld [vmem:[#allocation4 + $0xc] sm:$0xf]
    %612 = vrot.lane.b32.xlu0 %v83, 64
    %v613 = vpop.permute.xlu0 %612
    %vm615 = vcmask 523264
    %v616 = vsel %vm615, %v81, %v613
    %v617 = vlaneseq
    %v618 = vshrl.u32 %v617, 7
    %v619 = vadd.s32 %v618, 8
    %v620 = vadd.s32 %v618, 16
    %v621 = vadd.s32 %v618, 24
    %v622 = vlaneseq
    %v623 = vand.u32 %v622, 127
    %vm624 = vcmp.lt.s32.totalorder %v618, 16
    %vm625 = vcmp.lt.s32.totalorder %v619, 16
    %vm626 = vcmp.lt.s32.totalorder %v620, 16
    %vm627 = vcmp.lt.s32.totalorder %v621, 16
    %vm628 = vcmp.ge.s32.totalorder %v623, 64
    %vm629 = vmxor %vm624, %vm628
    %vm630 = vmxor %vm625, %vm628
    %vm631 = vmxor %vm626, %vm628
    %vm632 = vmxor %vm627, %vm628
    %v633 = vperm.slane %v616, 5
    %v638 = vunpack.c.l.b16 %v607
    %v639 = vunpack.c.l.b16 %v608
    %v640 = vunpack.c.l.b16 %v609
    %v641 = vunpack.c.l.b16 %v610
    %v642 = vpack.c.b16 %v639, %v638
    %v643 = vpack.c.b16 %v641, %v640
    %v647 = vsel %vm132, %v605, 0
    %v650 = vsel %vm132, %v606, 0
    %652 = vmatpush.bf16.msra.mxu0 0
    %653 = vmatpush.bf16.msra.mxu0 0
    %654 = vmatpush.bf16.msra.mxu0 0
    %655 = vmatpush.bf16.msra.mxu0 0
    %656 = vmatpush.bf16.msra.mxu0 0
    %657 = vmatpush.bf16.msra.mxu0 0
    %658 = vmatpush.bf16.msra.mxu0 %v643
    %659 = vmatpush.bf16.msra.mxu0 %v642
    %660 = vmatmul.bf16.gmra.mxu0 %v647
    %v661 = vpop.f32.mrf.mxu0
    %v662 = vadd.f32 %v633, %v661
    %v663 = vpop.f32.mrf.mxu0
    %v664 = vadd.f32 %v633, %v663
    %665 = vmatmul.bf16.gmra.mxu0 %v650
    %v666 = vpop.f32.mrf.mxu0
    %v667 = vadd.f32 %v633, %v666
    %v668 = vpop.f32.mrf.mxu0
    %v669 = vadd.f32 %v633, %v668
    %670 = vdwg.mxu0
    %v671 = vmax.f32 %v662, 0.0
    %v672 = vmax.f32 %v664, 0.0
    %v673 = vmax.f32 %v667, 0.0
    %v674 = vmax.f32 %v669, 0.0
    %v675 = vsel %vm629, %v671, 0.0
    %v676 = vsel %vm630, %v672, 0.0
    %v677 = vsel %vm631, %v673, 0.0
    %v678 = vsel %vm632, %v674, 0.0
    %v679 = vpack.c.bf16 %v676, %v675
    %v680 = vpack.c.bf16 %v678, %v677
    %v681 = vld [vmem:[%s5] sm:$0xf]
    %v682 = vld [vmem:[%s5 + $0x4] sm:$0xf]
    %v683 = vld [vmem:[%s5 + $0x8] sm:$0xf]
    %v684 = vld [vmem:[%s5 + $0xc] sm:$0xf]
    %v685 = vld [vmem:[%s5 + $0x10] sm:$0xf]
    %v686 = vld [vmem:[%s5 + $0x14] sm:$0xf]
    %v687 = vld [vmem:[%s5 + $0x18] sm:$0xf]
    %v688 = vld [vmem:[%s5 + $0x1c] sm:$0xf]
    %v689 = vld [vmem:[%s5 + $0x20] sm:$0xf]
    %v690 = vld [vmem:[%s5 + $0x24] sm:$0xf]
    %v691 = vld [vmem:[%s5 + $0x28] sm:$0xf]
    %v692 = vld [vmem:[%s5 + $0x2c] sm:$0xf]
    %v693 = vld [vmem:[%s5 + $0x30] sm:$0xf]
    %v694 = vld [vmem:[%s5 + $0x34] sm:$0xf]
    %v695 = vld [vmem:[%s5 + $0x38] sm:$0xf]
    %v696 = vld [vmem:[%s5 + $0x3c] sm:$0xf]
    %v713 = vunpack.c.l.b16 %v681
    %v714 = vunpack.c.l.b16 %v682
    %v715 = vunpack.c.l.b16 %v683
    %v716 = vunpack.c.l.b16 %v684
    %v717 = vunpack.c.l.b16 %v685
    %v718 = vunpack.c.l.b16 %v686
    %v719 = vunpack.c.l.b16 %v687
    %v720 = vunpack.c.l.b16 %v688
    %v721 = vunpack.c.l.b16 %v689
    %v722 = vunpack.c.l.b16 %v690
    %v723 = vunpack.c.l.b16 %v691
    %v724 = vunpack.c.l.b16 %v692
    %v725 = vunpack.c.l.b16 %v693
    %v726 = vunpack.c.l.b16 %v694
    %v727 = vunpack.c.l.b16 %v695
    %v728 = vunpack.c.l.b16 %v696
    %v729 = vpack.c.b16 %v714, %v713
    %v730 = vpack.c.b16 %v716, %v715
    %v731 = vpack.c.b16 %v718, %v717
    %v732 = vpack.c.b16 %v720, %v719
    %v733 = vpack.c.b16 %v722, %v721
    %v734 = vpack.c.b16 %v724, %v723
    %v735 = vpack.c.b16 %v726, %v725
    %v736 = vpack.c.b16 %v728, %v727
    %745 = vmatpush.bf16.msra.mxu0 %v736
    %746 = vmatpush.bf16.msra.mxu0 %v735
    %747 = vmatpush.bf16.msra.mxu0 %v734
    %748 = vmatpush.bf16.msra.mxu0 %v733
    %749 = vmatpush.bf16.msra.mxu0 %v732
    %750 = vmatpush.bf16.msra.mxu0 %v731
    %751 = vmatpush.bf16.msra.mxu0 %v730
    %752 = vmatpush.bf16.msra.mxu0 %v729
    %753 = vmatmul.bf16.gmra.mxu0 %v679
    %v754 = vpop.f32.mrf.mxu0
    %v755 = vadd.f32 0.0, %v754
    %v756 = vpop.f32.mrf.mxu0
    %v757 = vadd.f32 0.0, %v756
    %758 = vmatmul.bf16.gmra.mxu0 %v680
    %v759 = vpop.f32.mrf.mxu0
    %v760 = vadd.f32 0.0, %v759
    %v761 = vpop.f32.mrf.mxu0
    %v762 = vadd.f32 0.0, %v761
    %763 = vdwg.mxu0
    %v764 = vperm.slane %v81, 6
    %v765 = vadd.f32 %v755, %v764
    %v766 = vadd.f32 %v757, %v764
    %v767 = vadd.f32 %v765, %v395
    %v768 = vadd.f32 %v766, %v396
    %v769 = vsel %vm132, %v767, 0.0
    %770 = vadd.xlane.f32.xlu0 %v769
    %v771 = vpop.xlane.xlu0 %770
    %v772 = vsel %vm132, %v768, 0.0
    %773 = vadd.xlane.f32.xlu0 %v772
    %v774 = vpop.xlane.xlu0 %773
    %v775 = vmul.f32 %v771, %v342
    %v776 = vmul.f32 %v774, %v342
    %v777 = vsub.f32 %v767, %v775
    %v778 = vsub.f32 %v768, %v776
    %v779 = vmul.f32 %v777, %v777
    %v780 = vmul.f32 %v778, %v778
    %v781 = vsel %vm132, %v779, 0.0
    %782 = vadd.xlane.f32.xlu0 %v781
    %v783 = vpop.xlane.xlu0 %782
    %v784 = vsel %vm132, %v780, 0.0
    %785 = vadd.xlane.f32.xlu0 %v784
    %v786 = vpop.xlane.xlu0 %785
    %v787 = vmul.f32 %v783, %v342
    %v788 = vmul.f32 %v786, %v342
    %v789 = vadd.f32 %v787, 1e-05
    %v790 = vadd.f32 %v788, 1e-05
    %v791 = vrsqrt.pop %v789
    %v792 = vmul.f32 %v791, %v789
    %v793 = vmul.f32 %v792, %v791
    %v794 = vmul.f32 0.5, %v793
    %v795 = vsub.f32 1.5, %v794
    %v796 = vmul.f32 %v791, %v795
    %vm797 = vweird.f32 %v789
    %vm798 = vweird.f32 %v791
    %vm799 = vmor %vm797, %vm798
    %v800 = vsel %vm799, %v791, %v796
    %v801 = vrsqrt.pop %v790
    %v802 = vmul.f32 %v801, %v790
    %v803 = vmul.f32 %v802, %v801
    %v804 = vmul.f32 0.5, %v803
    %v805 = vsub.f32 1.5, %v804
    %v806 = vmul.f32 %v801, %v805
    %vm807 = vweird.f32 %v790
    %vm808 = vweird.f32 %v801
    %vm809 = vmor %vm807, %vm808
    %v810 = vsel %vm809, %v801, %v806
    %v811 = vmul.f32 %v777, %v800
    %v812 = vmul.f32 %v778, %v810
    %v813 = vperm.slane %v81, 7
    %v814 = vmul.f32 %v811, %v813
    %v815 = vmul.f32 %v812, %v813
    %v816 = vperm.slane %v82, 0
    %v817 = vadd.f32 %v814, %v816
    %v818 = vadd.f32 %v815, %v816
    %v819 = vmul.f32 %v817, %v389
    %v820 = vmul.f32 %v818, %v393
    %v821 = vperm.slane %v83, 6
    %v822 = vadd.f32 %v760, %v821
    %v823 = vadd.f32 %v762, %v821
    %v824 = vadd.f32 %v822, %v603
    %v825 = vadd.f32 %v823, %v604
    %v826 = vsel %vm132, %v824, 0.0
    %827 = vadd.xlane.f32.xlu0 %v826
    %v828 = vpop.xlane.xlu0 %827
    %v829 = vsel %vm132, %v825, 0.0
    %830 = vadd.xlane.f32.xlu0 %v829
    %v831 = vpop.xlane.xlu0 %830
    %v832 = vmul.f32 %v828, %v342
    %v833 = vmul.f32 %v831, %v342
    %v834 = vsub.f32 %v824, %v832
    %v835 = vsub.f32 %v825, %v833
    %v836 = vmul.f32 %v834, %v834
    %v837 = vmul.f32 %v835, %v835
    %v838 = vsel %vm132, %v836, 0.0
    %839 = vadd.xlane.f32.xlu0 %v838
    %v840 = vpop.xlane.xlu0 %839
    %v841 = vsel %vm132, %v837, 0.0
    %842 = vadd.xlane.f32.xlu0 %v841
    %v843 = vpop.xlane.xlu0 %842
    %v844 = vmul.f32 %v840, %v342
    %v845 = vmul.f32 %v843, %v342
    %v846 = vadd.f32 %v844, 1e-05
    %v847 = vadd.f32 %v845, 1e-05
    %v848 = vrsqrt.pop %v846
    %v849 = vmul.f32 %v848, %v846
    %v850 = vmul.f32 %v849, %v848
    %v851 = vmul.f32 0.5, %v850
    %v852 = vsub.f32 1.5, %v851
    %v853 = vmul.f32 %v848, %v852
    %vm854 = vweird.f32 %v846
    %vm855 = vweird.f32 %v848
    %vm856 = vmor %vm854, %vm855
    %v857 = vsel %vm856, %v848, %v853
    %v858 = vrsqrt.pop %v847
    %v859 = vmul.f32 %v858, %v847
    %v860 = vmul.f32 %v859, %v858
    %v861 = vmul.f32 0.5, %v860
    %v862 = vsub.f32 1.5, %v861
    %v863 = vmul.f32 %v858, %v862
    %vm864 = vweird.f32 %v847
    %vm865 = vweird.f32 %v858
    %vm866 = vmor %vm864, %vm865
    %v867 = vsel %vm866, %v858, %v863
    %v868 = vmul.f32 %v834, %v857
    %v869 = vmul.f32 %v835, %v867
    %v870 = vperm.slane %v83, 7
    %v871 = vmul.f32 %v868, %v870
    %v872 = vmul.f32 %v869, %v870
    %v873 = vperm.slane %v84, 0
    %v874 = vadd.f32 %v871, %v873
    %v875 = vadd.f32 %v872, %v873
    %v876 = vmul.f32 %v874, %v389
    %v877 = vmul.f32 %v875, %v393
    %878 = vst.msk [vmem:[%s7] sm:$0xff] %vm132, %v819
    %879 = vst.msk [vmem:[%s7 + $0x8] sm:$0xff] %vm132, %v820
    %880 = vst.msk [vmem:[%s7 + $0x10] sm:$0xff] %vm132, %v876
    %881 = vst.msk [vmem:[%s7 + $0x18] sm:$0xff] %vm132, %v877
    // Predicated region
    $region42: #{fwd.1} parent=1 // pred_check
      _
    $region43: #{fwd.1} parent=1 // pred_check_branch
      %883 = sbr.rel (0) target = $region45
    $region44: #{fwd.1} parent=1 // pred_region
      _
    $region45: #{fwd.1} parent=1 // pred_fallthru
      _
    // Predicated region
    $region46: #{fwd.1} parent=1 // pred_check
      _
    $region47: #{fwd.1} parent=1 // pred_check_branch
      %885 = sbr.rel (0) target = $region49
    $region48: #{fwd.1} parent=1 // pred_region
      _
    $region49: #{fwd.1} parent=1 // pred_fallthru
      _
    %886 = vsyncpa [#allocation3], 1
    %887 = vsyncpa [#allocation5], 1

</llo_original>
